<compile_context>
chip_gen: v6e
topology: v6e:2x2x1
jax: 0.10.0
libtpu: 0.0.40
codegen_flags: <defaults>
</compile_context>

<pallas_src>
import functools

import jax
import jax.numpy as jnp
from jax import lax
from jax.experimental import pallas as pl
from jax.experimental.pallas import tpu as pltpu

HIDDEN = 32        # encoder feature dim (spec: HIDDEN_DIM = 32)
ATTN_HIDDEN = 64   # hidden width of attn / mlp heads
ATTN_PAD = 128     # lane-padded hidden width
KSIZE = 3

# packed-parameter row layout (all rows are 128 lanes wide, zero padded)
R_A1 = 0                      # rows [0, 32)   : attn Linear(32,64) weight (in, out)
R_M1 = HIDDEN                 # rows [32, 64)  : mlp  Linear(32,64) weight
R_AB1 = 2 * HIDDEN            # row 64         : attn Linear(32,64) bias
R_MB1 = R_AB1 + 1             # row 65         : mlp  Linear(32,64) bias
R_A2 = R_AB1 + 2              # row 66         : attn Linear(64,1) weight as a row
R_M2 = R_AB1 + 3              # row 67         : mlp  Linear(64,1) weight as a row
R_BCONV = R_AB1 + 4           # row 68 cols[:32]: conv bias
R_AB2 = R_AB1 + 5             # row 69 col 0   : attn Linear(64,1) bias
R_MB2 = R_AB1 + 6             # row 70 col 0   : mlp  Linear(64,1) bias
PROWS = 72                    # padded to a multiple of 8 sublanes


def _round_up(x, m):
    return ((x + m - 1) // m) * m


def _tpu_vmem_and_cores():
    """Generation-aware VMEM capacity (bytes) and TensorCore count, with safe fallbacks."""
    vmem_cap = 64 * 1024 * 1024          # conservative minimum across v5e/v6e/v7x
    cores = 1
    try:
        info = pltpu.get_tpu_info()
        cap = getattr(info, "vmem_capacity_bytes", None)
        if isinstance(cap, int) and cap > 0:
            vmem_cap = cap
        for attr in ("num_tensorcores", "tensorcore_count", "num_cores", "core_count"):
            v = getattr(info, attr, None)
            if isinstance(v, int) and v > 0:
                cores = v
                break
    except Exception:
        pass
    return vmem_cap, cores


def _choose_bags(B, N, L, outw, vmem_budget, cores):
    """Bags per grid step from a lane/sublane-padding-aware VMEM estimate."""
    lp2 = _round_up(L + 2, 16)                     # bf16 sublane padding of the streamed time axis
    per_bag = (
        2 * N * lp2 * 128 * 2                      # streamed input tile (C -> 128 lanes), x2 double buffer, bf16
        + 2 * N * _round_up(L, 8) * 128 * 4        # conv activations + one live tap product (H -> 128 lanes), f32
        + 4 * _round_up(N, 8) * 128 * 4            # feat / attn-hidden / classifier rows, f32
        + 2 * outw * 4                             # packed output row, x2 double buffer, f32
    )
    bags = max(1, min(B, vmem_budget // max(per_bag, 1)))
    if cores >= 2 and B >= 2:
        bags = min(bags, (B + 1) // 2)             # >= 2 grid steps only when there are >= 2 TCs (v7x)
    return bags


def mil_kernel(x_ref, w_ref, pp_ref, out_ref, *, bags, n, l, outw):
    # x_ref : (1, bags*n, l+2, C)  bf16   zero-padded time axis, channels last
    # w_ref : (KSIZE, C, H)        bf16   conv taps
    # pp_ref: (PROWS, 128)         f32    packed attn/mlp/conv-bias parameters
    # out_ref: (1, bags, outw)     f32    packed [attn(n) | out(1) | zeros] per bag
    bn = bags * n
    c = x_ref.shape[-1]
    hdim = w_ref.shape[-1]

    x = x_ref[0]                                             # (bn, l+2, c) bf16

    # ---- Conv1d(C->H, k=3, pad=1): three shifted MXU dots accumulated in f32 ----
    acc = None
    for k in range(KSIZE):
        xk = x[:, k:k + l, :].reshape(bn * l, c)             # static slice; merge free when l % 8 == 0
        yk = jnp.dot(xk, w_ref[k], preferred_element_type=jnp.float32)   # (bn*l, H)
        acc = yk if acc is None else acc + yk
    bconv = pp_ref[R_BCONV:R_BCONV + 1, 0:hdim]              # (1, H)
    hfull = jnp.maximum(acc + bconv, 0.0)                    # encoder ReLU, f32

    # ---- temporal mean pool (constant 1/L multiply) ----
    feat = jnp.sum(hfull.reshape(bn, l, hdim), axis=1) * (1.0 / l)       # (bn, H)

    # ---- attention scores: Linear(H,64) -> tanh -> Linear(64,1) (64 zero-padded to 128) ----
    a1 = pp_ref[R_A1:R_A1 + HIDDEN, :]                       # (H, 128)
    ab1 = pp_ref[R_AB1:R_AB1 + 1, :]                         # (1, 128)
    a2r = pp_ref[R_A2:R_A2 + 1, :]                           # (1, 128) (cols>=64 zero)
    ab2 = pp_ref[R_AB2:R_AB2 + 1, 0:1]                       # (1, 1)
    ah = jnp.tanh(jnp.dot(feat, a1, preferred_element_type=jnp.float32) + ab1)
    scores = jnp.sum(ah * a2r, axis=-1, keepdims=True) + ab2             # (bn, 1)
    scores3 = scores.reshape(bags, n, 1)                     # sublane split (instances stay on sublanes)

    # ---- per-bag softmax over the N instances, in sublane layout (EUP reciprocal) ----
    mx = jnp.max(scores3, axis=1, keepdims=True)
    e = jnp.exp(scores3 - mx)
    w3 = e * pl.reciprocal(jnp.sum(e, axis=1, keepdims=True), approx=True)   # (bags, n, 1)

    # ---- attention-weighted bag representation ----
    feat3 = feat.reshape(bags, n, hdim)
    bag_repr = jnp.sum(w3 * feat3, axis=1)                   # (bags, H)

    # ---- classifier: Linear(H,64) -> ReLU -> [Dropout = identity] -> Linear(64,1) ----
    m1 = pp_ref[R_M1:R_M1 + HIDDEN, :]
    mb1 = pp_ref[R_MB1:R_MB1 + 1, :]
    m2r = pp_ref[R_M2:R_M2 + 1, :]
    mb2 = pp_ref[R_MB2:R_MB2 + 1, 0:1]
    z = jnp.maximum(jnp.dot(bag_repr, m1, preferred_element_type=jnp.float32) + mb1, 0.0)
    o = jnp.sum(z * m2r, axis=-1, keepdims=True) + mb2       # (bags, 1)

    # ---- lane-ize the attention weights once (broadcast + sublane reduce; no tricky reshape) ----
    ii = lax.broadcasted_iota(jnp.int32, (n, n), 0)
    jj = lax.broadcasted_iota(jnp.int32, (n, n), 1)
    eye = (ii == jj).astype(jnp.float32)                     # (n, n)
    w_lane = jnp.sum(w3 * eye[None, :, :], axis=1)           # (bags, n) with n on lanes

    # ---- ONE full-width lane-dense store of the packed [attn | out | zeros] block ----
    pieces = [w_lane, o]
    pad_w = outw - n - 1
    if pad_w > 0:
        pieces.append(jnp.zeros((bags, pad_w), jnp.float32))
    out_ref[0] = jnp.concatenate(pieces, axis=-1)


def _pack_params(p):
    H, AH = HIDDEN, ATTN_HIDDEN
    pp = jnp.zeros((PROWS, ATTN_PAD), jnp.float32)
    pp = pp.at[R_A1:R_A1 + H, :AH].set(p["a1_w"].T)
    pp = pp.at[R_M1:R_M1 + H, :AH].set(p["m1_w"].T)
    pp = pp.at[R_AB1, :AH].set(p["a1_b"])
    pp = pp.at[R_MB1, :AH].set(p["m1_b"])
    pp = pp.at[R_A2, :AH].set(p["a2_w"][0])
    pp = pp.at[R_M2, :AH].set(p["m2_w"][0])
    pp = pp.at[R_BCONV, :H].set(p["conv_b"])
    pp = pp.at[R_AB2, 0].set(p["a2_b"][0])
    pp = pp.at[R_MB2, 0].set(p["m2_b"][0])
    return pp


def time_attention_mil(bag, params):
    """bag: (B, N, C, L) float32 (PyTorch layout). Returns (out (B,), attn_weights (B, N))."""
    B, N, C, L = bag.shape
    outw = max(128, _round_up(N + 1, 128))

    vmem_cap, cores = _tpu_vmem_and_cores()
    vmem_budget = int(vmem_cap * 0.6)                        # ~76 MiB v5e/v6e, ~38 MiB v7x
    vmem_limit = min(int(vmem_cap * 0.85), 100 * 1024 * 1024)
    bags = _choose_bags(B, N, L, outw, vmem_budget, cores)
    B_pad = _round_up(B, bags)
    num_blocks = B_pad // bags

    # glue: channels-last + zero time-pad + bf16 cast (no im2col expansion)
    x = jnp.transpose(bag, (0, 1, 3, 2))                     # (B, N, L, C)
    xp = jnp.pad(x, ((0, 0), (0, 0), (1, 1), (0, 0))).astype(jnp.bfloat16)
    if B_pad != B:
        xp = jnp.pad(xp, ((0, B_pad - B), (0, 0), (0, 0), (0, 0)))
    xs = xp.reshape(num_blocks, bags * N, L + 2, C)          # leading-dim merge done wrapper-side

    # conv weight (out, in, k) -> per-tap (k, in, out), bf16
    wtap = jnp.transpose(params["conv_w"], (2, 1, 0)).astype(jnp.bfloat16)   # (KSIZE, C, H)
    pp = _pack_params(params)

    kern = functools.partial(mil_kernel, bags=bags, n=N, l=L, outw=outw)
    packed = pl.pallas_call(
        kern,
        out_shape=jax.ShapeDtypeStruct((num_blocks, bags, outw), jnp.float32),
        grid_spec=pltpu.PrefetchScalarGridSpec(
            num_scalar_prefetch=0,
            grid=(num_blocks,),
            in_specs=[
                pl.BlockSpec((1, bags * N, L + 2, C), lambda b: (b, 0, 0, 0)),
                pl.BlockSpec((KSIZE, C, HIDDEN), lambda b: (0, 0, 0)),
                pl.BlockSpec((PROWS, ATTN_PAD), lambda b: (0, 0)),
            ],
            out_specs=pl.BlockSpec((1, bags, outw), lambda b: (b, 0, 0)),
        ),
        compiler_params=pltpu.CompilerParams(
            dimension_semantics=("parallel",),
            vmem_limit_bytes=vmem_limit,
        ),
    )(xs, wtap, pp)

    packed = packed.reshape(B_pad, outw)[:B]
    return packed[:, N], packed[:, :N]


def make_params(key, C):
    ks = jax.random.split(key, 10)

    def lin(k, fan_in, shape):
        b = 1.0 / jnp.sqrt(jnp.float32(fan_in))
        return jax.random.uniform(k, shape, jnp.float32, -b, b)

    return dict(
        conv_w=lin(ks[0], C * KSIZE, (HIDDEN, C, KSIZE)),   # torch Conv1d weight (out, in, k)
        conv_b=lin(ks[1], C * KSIZE, (HIDDEN,)),
        a1_w=lin(ks[2], HIDDEN, (ATTN_HIDDEN, HIDDEN)),     # torch Linear weight (out, in)
        a1_b=lin(ks[3], HIDDEN, (ATTN_HIDDEN,)),
        a2_w=lin(ks[4], ATTN_HIDDEN, (1, ATTN_HIDDEN)),
        a2_b=lin(ks[5], ATTN_HIDDEN, (1,)),
        m1_w=lin(ks[6], HIDDEN, (ATTN_HIDDEN, HIDDEN)),
        m1_b=lin(ks[7], HIDDEN, (ATTN_HIDDEN,)),
        m2_w=lin(ks[8], ATTN_HIDDEN, (1, ATTN_HIDDEN)),
        m2_b=lin(ks[9], ATTN_HIDDEN, (1,)),
    )


def reference(bag, p):
    """Pure-JAX f32 reference mirroring the PyTorch forward (eval mode)."""
    B, N, C, L = bag.shape
    x = bag.reshape(B * N, C, L)
    y = lax.conv_general_dilated(x, p["conv_w"], (1,), [(1, 1)],
                                 dimension_numbers=("NCH", "OIH", "NCH"))
    y = y + p["conv_b"][None, :, None]
    feat = jnp.maximum(y, 0.0).mean(axis=2).reshape(B, N, -1)
    s = (jnp.tanh(feat @ p["a1_w"].T + p["a1_b"]) @ p["a2_w"].T + p["a2_b"])[..., 0]
    w = jax.nn.softmax(s, axis=1)
    bag_repr = jnp.sum(w[..., None] * feat, axis=1)
    z = jnp.maximum(bag_repr @ p["m1_w"].T + p["m1_b"], 0.0)
    out = (z @ p["m2_w"].T + p["m2_b"])[..., 0]
    return out, w


if __name__ == "__main__":
    B, N, C, L = 2, 8, 4, 16
    key = jax.random.PRNGKey(0)
    k_bag, k_param = jax.random.split(key)
    bag = jax.random.normal(k_bag, (B, N, C, L), jnp.float32)
    params = make_params(k_param, C)

    out, attn_weights = time_attention_mil(bag, params)
    (out, attn_weights) = jax.block_until_ready((out, attn_weights))

    out_ref, attn_ref = reference(bag, params)
    assert out.shape == (B,) and attn_weights.shape == (B, N)
    # tolerances sized for the bf16 activation stream (all dots accumulate in f32)
    assert jnp.allclose(out, out_ref, atol=2e-2, rtol=2e-2)
    assert jnp.allclose(attn_weights, attn_ref, atol=2e-2, rtol=2e-2)
    print("KERNEL_OK")
</pallas_src>

<mosaic_0001>
module attributes {stable_mosaic.version = 11 : i64} {
  func.func @mil_kernel(%arg0: i32, %arg1: memref<1x16x18x4xbf16, #tpu.memory_space<vmem>>, %arg2: memref<3x4x32xbf16, #tpu.memory_space<vmem>>, %arg3: memref<72x128xf32, #tpu.memory_space<vmem>>, %arg4: memref<1x2x128xf32, #tpu.memory_space<vmem>>) attributes {dimension_semantics = [#tpu.dimension_semantics<parallel>], iteration_bounds = array<i64: 1>, scalar_prefetch = 0 : i64, scratch_operands = 0 : i64, tpu.core_type = #tpu.core_type<tc>, window_params = [{transform_indices = @transform_0, window_bounds = array<i64: 1, 16, 18, 4>}, {pipeline_mode = #tpu.pipeline_mode<synchronous>, transform_indices = @transform_1, window_bounds = array<i64: 3, 4, 32>}, {pipeline_mode = #tpu.pipeline_mode<synchronous>, transform_indices = @transform_2, window_bounds = array<i64: 72, 128>}, {transform_indices = @transform_3, window_bounds = array<i64: 1, 2, 128>}]} {
    %c0 = arith.constant 0 : index
    %c0_0 = arith.constant 0 : index
    %c0_1 = arith.constant 0 : index
    %c0_2 = arith.constant 0 : index
    %0 = vector.load %arg1[%c0, %c0_0, %c0_1, %c0_2] : memref<1x16x18x4xbf16, #tpu.memory_space<vmem>>, vector<1x16x18x4xbf16>
    %1 = vector.shape_cast %0 : vector<1x16x18x4xbf16> to vector<16x18x4xbf16>
    %2 = vector.extract_strided_slice %1 {offsets = [0, 0, 0], sizes = [16, 16, 4], strides = [1, 1, 1]} : vector<16x18x4xbf16> to vector<16x16x4xbf16>
    %3 = vector.shape_cast %2 : vector<16x16x4xbf16> to vector<256x4xbf16>
    %c0_3 = arith.constant 0 : index
    %c0_4 = arith.constant 0 : index
    %c0_5 = arith.constant 0 : index
    %4 = vector.load %arg2[%c0_3, %c0_4, %c0_5] : memref<3x4x32xbf16, #tpu.memory_space<vmem>>, vector<1x4x32xbf16>
    %5 = vector.shape_cast %4 : vector<1x4x32xbf16> to vector<4x32xbf16>
    %cst = arith.constant dense<0.000000e+00> : vector<256x32xf32>
    %6 = tpu.matmul %3, %5, %cst {dimension_numbers = #tpu.dot_dimension_numbers<[1], [0], [0], [1], [0, 0, 1, 1], [], []>} : vector<256x4xbf16>, vector<4x32xbf16>, vector<256x32xf32> -> vector<256x32xf32>
    %7 = vector.extract_strided_slice %1 {offsets = [0, 1, 0], sizes = [16, 16, 4], strides = [1, 1, 1]} : vector<16x18x4xbf16> to vector<16x16x4xbf16>
    %8 = vector.shape_cast %7 : vector<16x16x4xbf16> to vector<256x4xbf16>
    %c1 = arith.constant 1 : index
    %c0_6 = arith.constant 0 : index
    %c0_7 = arith.constant 0 : index
    %9 = vector.load %arg2[%c1, %c0_6, %c0_7] : memref<3x4x32xbf16, #tpu.memory_space<vmem>>, vector<1x4x32xbf16>
    %10 = vector.shape_cast %9 : vector<1x4x32xbf16> to vector<4x32xbf16>
    %cst_8 = arith.constant dense<0.000000e+00> : vector<256x32xf32>
    %11 = tpu.matmul %8, %10, %cst_8 {dimension_numbers = #tpu.dot_dimension_numbers<[1], [0], [0], [1], [0, 0, 1, 1], [], []>} : vector<256x4xbf16>, vector<4x32xbf16>, vector<256x32xf32> -> vector<256x32xf32>
    %12 = arith.addf %6, %11 : vector<256x32xf32>
    %13 = vector.extract_strided_slice %1 {offsets = [0, 2, 0], sizes = [16, 16, 4], strides = [1, 1, 1]} : vector<16x18x4xbf16> to vector<16x16x4xbf16>
    %14 = vector.shape_cast %13 : vector<16x16x4xbf16> to vector<256x4xbf16>
    %c2 = arith.constant 2 : index
    %c0_9 = arith.constant 0 : index
    %c0_10 = arith.constant 0 : index
    %15 = vector.load %arg2[%c2, %c0_9, %c0_10] : memref<3x4x32xbf16, #tpu.memory_space<vmem>>, vector<1x4x32xbf16>
    %16 = vector.shape_cast %15 : vector<1x4x32xbf16> to vector<4x32xbf16>
    %cst_11 = arith.constant dense<0.000000e+00> : vector<256x32xf32>
    %17 = tpu.matmul %14, %16, %cst_11 {dimension_numbers = #tpu.dot_dimension_numbers<[1], [0], [0], [1], [0, 0, 1, 1], [], []>} : vector<256x4xbf16>, vector<4x32xbf16>, vector<256x32xf32> -> vector<256x32xf32>
    %18 = arith.addf %12, %17 : vector<256x32xf32>
    %c68 = arith.constant 68 : index
    %c0_12 = arith.constant 0 : index
    %19 = vector.load %arg3[%c68, %c0_12] : memref<72x128xf32, #tpu.memory_space<vmem>>, vector<1x32xf32>
    %20 = vector.broadcast %19 : vector<1x32xf32> to vector<256x32xf32>
    %21 = arith.addf %18, %20 : vector<256x32xf32>
    %cst_13 = arith.constant 0.000000e+00 : f32
    %22 = vector.broadcast %cst_13 : f32 to vector<256x32xf32>
    %23 = arith.maximumf %21, %22 : vector<256x32xf32>
    %24 = vector.shape_cast %23 : vector<256x32xf32> to vector<16x16x32xf32>
    %cst_14 = arith.constant dense<0.000000e+00> : vector<16x32xf32>
    %25 = vector.multi_reduction <add>, %24, %cst_14 [1] : vector<16x16x32xf32> to vector<16x32xf32>
    %cst_15 = arith.constant 6.250000e-02 : f32
    %26 = vector.broadcast %cst_15 : f32 to vector<16x32xf32>
    %27 = arith.mulf %25, %26 : vector<16x32xf32>
    %c0_16 = arith.constant 0 : index
    %c0_17 = arith.constant 0 : index
    %28 = vector.load %arg3[%c0_16, %c0_17] : memref<72x128xf32, #tpu.memory_space<vmem>>, vector<32x128xf32>
    %c64 = arith.constant 64 : index
    %c0_18 = arith.constant 0 : index
    %29 = vector.load %arg3[%c64, %c0_18] : memref<72x128xf32, #tpu.memory_space<vmem>>, vector<1x128xf32>
    %c66 = arith.constant 66 : index
    %c0_19 = arith.constant 0 : index
    %30 = vector.load %arg3[%c66, %c0_19] : memref<72x128xf32, #tpu.memory_space<vmem>>, vector<1x128xf32>
    %c69 = arith.constant 69 : index
    %c0_20 = arith.constant 0 : index
    %31 = vector.load %arg3[%c69, %c0_20] : memref<72x128xf32, #tpu.memory_space<vmem>>, vector<1x1xf32>
    %cst_21 = arith.constant dense<0.000000e+00> : vector<16x128xf32>
    %32 = tpu.matmul %27, %28, %cst_21 {dimension_numbers = #tpu.dot_dimension_numbers<[1], [0], [0], [1], [0, 0, 1, 1], [], []>} : vector<16x32xf32>, vector<32x128xf32>, vector<16x128xf32> -> vector<16x128xf32>
    %33 = vector.broadcast %29 : vector<1x128xf32> to vector<16x128xf32>
    %34 = arith.addf %32, %33 : vector<16x128xf32>
    %35 = math.tanh %34 : vector<16x128xf32>
    %36 = vector.broadcast %30 : vector<1x128xf32> to vector<16x128xf32>
    %37 = arith.mulf %35, %36 : vector<16x128xf32>
    %cst_22 = arith.constant dense<0.000000e+00> : vector<16xf32>
    %38 = vector.multi_reduction <add>, %37, %cst_22 [1] : vector<16x128xf32> to vector<16xf32>
    %39 = vector.shape_cast %38 : vector<16xf32> to vector<16x1xf32>
    %40 = vector.broadcast %31 : vector<1x1xf32> to vector<16x1xf32>
    %41 = arith.addf %39, %40 : vector<16x1xf32>
    %42 = vector.shape_cast %41 : vector<16x1xf32> to vector<2x8x1xf32>
    %cst_23 = arith.constant dense<0xFF800000> : vector<2x1xf32>
    %43 = vector.multi_reduction <maximumf>, %42, %cst_23 [1] : vector<2x8x1xf32> to vector<2x1xf32>
    %44 = vector.shape_cast %43 : vector<2x1xf32> to vector<2x1x1xf32>
    %45 = vector.broadcast %44 : vector<2x1x1xf32> to vector<2x8x1xf32>
    %46 = arith.subf %42, %45 : vector<2x8x1xf32>
    %47 = math.exp %46 : vector<2x8x1xf32>
    %cst_24 = arith.constant dense<0.000000e+00> : vector<2x1xf32>
    %48 = vector.multi_reduction <add>, %47, %cst_24 [1] : vector<2x8x1xf32> to vector<2x1xf32>
    %49 = vector.shape_cast %48 : vector<2x1xf32> to vector<2x1x1xf32>
    %50 = tpu.reciprocal %49 {approx = true} : vector<2x1x1xf32> -> vector<2x1x1xf32>
    %51 = vector.broadcast %50 : vector<2x1x1xf32> to vector<2x8x1xf32>
    %52 = arith.mulf %47, %51 : vector<2x8x1xf32>
    %53 = vector.shape_cast %27 : vector<16x32xf32> to vector<2x8x32xf32>
    %54 = vector.broadcast %52 : vector<2x8x1xf32> to vector<2x8x32xf32>
    %55 = arith.mulf %54, %53 : vector<2x8x32xf32>
    %cst_25 = arith.constant dense<0.000000e+00> : vector<2x32xf32>
    %56 = vector.multi_reduction <add>, %55, %cst_25 [1] : vector<2x8x32xf32> to vector<2x32xf32>
    %c32 = arith.constant 32 : index
    %c0_26 = arith.constant 0 : index
    %57 = vector.load %arg3[%c32, %c0_26] : memref<72x128xf32, #tpu.memory_space<vmem>>, vector<32x128xf32>
    %c65 = arith.constant 65 : index
    %c0_27 = arith.constant 0 : index
    %58 = vector.load %arg3[%c65, %c0_27] : memref<72x128xf32, #tpu.memory_space<vmem>>, vector<1x128xf32>
    %c67 = arith.constant 67 : index
    %c0_28 = arith.constant 0 : index
    %59 = vector.load %arg3[%c67, %c0_28] : memref<72x128xf32, #tpu.memory_space<vmem>>, vector<1x128xf32>
    %c70 = arith.constant 70 : index
    %c0_29 = arith.constant 0 : index
    %60 = vector.load %arg3[%c70, %c0_29] : memref<72x128xf32, #tpu.memory_space<vmem>>, vector<1x1xf32>
    %cst_30 = arith.constant dense<0.000000e+00> : vector<2x128xf32>
    %61 = tpu.matmul %56, %57, %cst_30 {dimension_numbers = #tpu.dot_dimension_numbers<[1], [0], [0], [1], [0, 0, 1, 1], [], []>} : vector<2x32xf32>, vector<32x128xf32>, vector<2x128xf32> -> vector<2x128xf32>
    %62 = vector.broadcast %58 : vector<1x128xf32> to vector<2x128xf32>
    %63 = arith.addf %61, %62 : vector<2x128xf32>
    %cst_31 = arith.constant 0.000000e+00 : f32
    %64 = vector.broadcast %cst_31 : f32 to vector<2x128xf32>
    %65 = arith.maximumf %63, %64 : vector<2x128xf32>
    %66 = vector.broadcast %59 : vector<1x128xf32> to vector<2x128xf32>
    %67 = arith.mulf %65, %66 : vector<2x128xf32>
    %cst_32 = arith.constant dense<0.000000e+00> : vector<2xf32>
    %68 = vector.multi_reduction <add>, %67, %cst_32 [1] : vector<2x128xf32> to vector<2xf32>
    %69 = vector.shape_cast %68 : vector<2xf32> to vector<2x1xf32>
    %70 = vector.broadcast %60 : vector<1x1xf32> to vector<2x1xf32>
    %71 = arith.addf %69, %70 : vector<2x1xf32>
    %72 = tpu.iota {dimensions = array<i32: 0>} : vector<8x8xi32>
    %73 = tpu.iota {dimensions = array<i32: 1>} : vector<8x8xi32>
    %74 = arith.cmpi eq, %72, %73 : vector<8x8xi32>
    %75 = arith.extui %74 : vector<8x8xi1> to vector<8x8xi32>
    %76 = arith.sitofp %75 : vector<8x8xi32> to vector<8x8xf32>
    %77 = vector.shape_cast %76 : vector<8x8xf32> to vector<1x8x8xf32>
    %78 = vector.broadcast %52 : vector<2x8x1xf32> to vector<2x8x8xf32>
    %79 = vector.broadcast %77 : vector<1x8x8xf32> to vector<2x8x8xf32>
    %80 = arith.mulf %78, %79 : vector<2x8x8xf32>
    %cst_33 = arith.constant dense<0.000000e+00> : vector<2x8xf32>
    %81 = vector.multi_reduction <add>, %80, %cst_33 [1] : vector<2x8x8xf32> to vector<2x8xf32>
    %cst_34 = arith.constant 0.000000e+00 : f32
    %82 = vector.broadcast %cst_34 : f32 to vector<2x119xf32>
    %83 = tpu.concatenate %81, %71, %82 in 1 : vector<2x8xf32>, vector<2x1xf32>, vector<2x119xf32> -> vector<2x128xf32>
    %c0_35 = arith.constant 0 : index
    %c0_36 = arith.constant 0 : index
    %c0_37 = arith.constant 0 : index
    %84 = vector.load %arg4[%c0_35, %c0_36, %c0_37] : memref<1x2x128xf32, #tpu.memory_space<vmem>>, vector<1x2x128xf32>
    %85 = vector.shape_cast %84 : vector<1x2x128xf32> to vector<2x128xf32>
    %86 = vector.shape_cast %83 : vector<2x128xf32> to vector<1x2x128xf32>
    tpu.vector_store %arg4[%c0_35, %c0_36, %c0_37], %86 {strides = array<i32>} : memref<1x2x128xf32, #tpu.memory_space<vmem>>, vector<1x2x128xf32>,
    return
  }
  func.func @transform_0(%arg0: i32) -> (i32, i32, i32, i32) {
    %c0_i32 = arith.constant 0 : i32
    %c0_i32_0 = arith.constant 0 : i32
    %c0_i32_1 = arith.constant 0 : i32
    %c0_i32_2 = arith.constant 0 : i32
    return %arg0, %c0_i32, %c0_i32_0, %c0_i32_1 : i32, i32, i32, i32
  }
  func.func @transform_1(%arg0: i32) -> (i32, i32, i32) {
    %c0_i32 = arith.constant 0 : i32
    %c0_i32_0 = arith.constant 0 : i32
    %c0_i32_1 = arith.constant 0 : i32
    %c0_i32_2 = arith.constant 0 : i32
    return %c0_i32, %c0_i32_0, %c0_i32_1 : i32, i32, i32
  }
  func.func @transform_2(%arg0: i32) -> (i32, i32) {
    %c0_i32 = arith.constant 0 : i32
    %c0_i32_0 = arith.constant 0 : i32
    %c0_i32_1 = arith.constant 0 : i32
    return %c0_i32, %c0_i32_0 : i32, i32
  }
  func.func @transform_3(%arg0: i32) -> (i32, i32, i32) {
    %c0_i32 = arith.constant 0 : i32
    %c0_i32_0 = arith.constant 0 : i32
    %c0_i32_1 = arith.constant 0 : i32
    return %arg0, %c0_i32, %c0_i32_0 : i32, i32, i32
  }
}

</mosaic_0001>

<llo_original>
// kernel: tpu_custom_call.1
$region0: #{tpu_custom_call.1}
  #allocation0 [shape = 'u32[]', space=smem, size = 0x4, offset = 0x4, fixed_abs, tag = 'smem constant byte address 0x4 - core index']
  #allocation1 [shape = 'u32[144,128]{1,0:T(1,128)}', space=vmem, size = 0x12000, scoped, tag = 'internal scratch']
  %s0 = inlined_call_operand.vmem [shape: bf16[1,16,18,4], index: 0, kind: input, shape index: {}]
  %s1 = inlined_call_operand.vmem [shape: bf16[3,4,32], index: 1, kind: input, shape index: {}]
  %s2 = inlined_call_operand.vmem [shape: f32[72,128], index: 2, kind: input, shape index: {}]
  %s3 = inlined_call_operand.hbm [shape: f32[1,2,128], index: 3, kind: output, shape index: {}]
  %s4 = sld [smem:[#allocation0]]
  $region22: #{tpu_custom_call.1} parent=0
    _
  %s6 = ssub.s32 1, %s4
  %s7 = scalar_select 0, %s6, %s4
  $region1: #{tpu_custom_call.1} parent=0
    #allocation2 [shape = 'u8[1024]{0}', space=vmem, size = 0x400, scoped, tag = 'output window, operand 0, single buffered']
    #allocation3 [shape = 's32[1]{0}', space=sflag, size = 0x4, scoped, tag = 'scoped memory for tpu_custom_call.1']
    %8 = vsyncpa [#allocation3], 0
    // Predicated region
    $region2: #{tpu_custom_call.1} parent=1 // pred_check
      _
    $region3: #{tpu_custom_call.1} parent=1 // pred_check_branch
      %10 = sbr.rel (0) target = $region5
    $region4: #{tpu_custom_call.1} parent=1 // pred_region
      _
    $region5: #{tpu_custom_call.1} parent=1 // pred_fallthru
      _
    // Predicated region
    $region6: #{tpu_custom_call.1} parent=1 // pred_check
      _
    $region7: #{tpu_custom_call.1} parent=1 // pred_check_branch
      %12 = sbr.rel (0) target = $region9
    $region8: #{tpu_custom_call.1} parent=1 // pred_region
      _
    $region9: #{tpu_custom_call.1} parent=1 // pred_fallthru
      _
    // Predicated region
    $region10: #{tpu_custom_call.1} parent=1 // pred_check
      _
    $region11: #{tpu_custom_call.1} parent=1 // pred_check_branch
      %14 = sbr.rel (0) target = $region13
    $region12: #{tpu_custom_call.1} parent=1 // pred_region
      _
    $region13: #{tpu_custom_call.1} parent=1 // pred_fallthru
      _
    %v16 = vld [vmem:[%s0] sm:$0xf]
    %v17 = vld [vmem:[%s0 + $0x4] sm:$0xf]
    %v18 = vld [vmem:[%s0 + $0x8] sm:$0x1]
    %v19 = vld [vmem:[%s0 + $0xc] sm:$0xf]
    %v20 = vld [vmem:[%s0 + $0x10] sm:$0xf]
    %v21 = vld [vmem:[%s0 + $0x14] sm:$0x1]
    %v22 = vld [vmem:[%s0 + $0x18] sm:$0xf]
    %v23 = vld [vmem:[%s0 + $0x1c] sm:$0xf]
    %v24 = vld [vmem:[%s0 + $0x20] sm:$0x1]
    %v25 = vld [vmem:[%s0 + $0x24] sm:$0xf]
    %v26 = vld [vmem:[%s0 + $0x28] sm:$0xf]
    %v27 = vld [vmem:[%s0 + $0x2c] sm:$0x1]
    %v28 = vld [vmem:[%s0 + $0x30] sm:$0xf]
    %v29 = vld [vmem:[%s0 + $0x34] sm:$0xf]
    %v30 = vld [vmem:[%s0 + $0x38] sm:$0x1]
    %v31 = vld [vmem:[%s0 + $0x3c] sm:$0xf]
    %v32 = vld [vmem:[%s0 + $0x40] sm:$0xf]
    %v33 = vld [vmem:[%s0 + $0x44] sm:$0x1]
    %v34 = vld [vmem:[%s0 + $0x48] sm:$0xf]
    %v35 = vld [vmem:[%s0 + $0x4c] sm:$0xf]
    %v36 = vld [vmem:[%s0 + $0x50] sm:$0x1]
    %v37 = vld [vmem:[%s0 + $0x54] sm:$0xf]
    %v38 = vld [vmem:[%s0 + $0x58] sm:$0xf]
    %v39 = vld [vmem:[%s0 + $0x5c] sm:$0x1]
    %v40 = vld [vmem:[%s0 + $0x60] sm:$0xf]
    %v41 = vld [vmem:[%s0 + $0x64] sm:$0xf]
    %v42 = vld [vmem:[%s0 + $0x68] sm:$0x1]
    %v43 = vld [vmem:[%s0 + $0x6c] sm:$0xf]
    %v44 = vld [vmem:[%s0 + $0x70] sm:$0xf]
    %v45 = vld [vmem:[%s0 + $0x74] sm:$0x1]
    %v46 = vld [vmem:[%s0 + $0x78] sm:$0xf]
    %v47 = vld [vmem:[%s0 + $0x7c] sm:$0xf]
    %v48 = vld [vmem:[%s0 + $0x80] sm:$0x1]
    %v49 = vld [vmem:[%s0 + $0x84] sm:$0xf]
    %v50 = vld [vmem:[%s0 + $0x88] sm:$0xf]
    %v51 = vld [vmem:[%s0 + $0x8c] sm:$0x1]
    %v52 = vld [vmem:[%s0 + $0x90] sm:$0xf]
    %v53 = vld [vmem:[%s0 + $0x94] sm:$0xf]
    %v54 = vld [vmem:[%s0 + $0x98] sm:$0x1]
    %v55 = vld [vmem:[%s0 + $0x9c] sm:$0xf]
    %v56 = vld [vmem:[%s0 + $0xa0] sm:$0xf]
    %v57 = vld [vmem:[%s0 + $0xa4] sm:$0x1]
    %v58 = vld [vmem:[%s0 + $0xa8] sm:$0xf]
    %v59 = vld [vmem:[%s0 + $0xac] sm:$0xf]
    %v60 = vld [vmem:[%s0 + $0xb0] sm:$0x1]
    %v61 = vld [vmem:[%s0 + $0xb4] sm:$0xf]
    %v62 = vld [vmem:[%s0 + $0xb8] sm:$0xf]
    %v63 = vld [vmem:[%s0 + $0xbc] sm:$0x1]
    %v64 = vld [vmem:[%s1] sm:$0x3]
    %vm65 = vsmask.f32 3328
    %vm66 = vsmask.f32 7440
    %vm67 = vmor %vm65, %vm66
    %v69 = vshrl.u32 %v16, 16
    %v71 = vrot.slane %v69, 4
    %v72 = vshll.u32 %v16, 16
    %v74 = vrot.slane %v72, 5
    %v75 = vor.u32 %v71, %v74
    %v76 = vrot.slane %v75, 4
    %v78 = vshll.u32 %v17, 16
    %v80 = vrot.slane %v78, 5
    %v81 = vsel %vm67, %v76, %v80
    %v82 = vshrl.u32 %v17, 16
    %v84 = vrot.slane %v82, 4
    %v85 = vor.u32 %v84, %v80
    %v86 = vrot.slane %v85, 4
    %v88 = vshll.u32 %v18, 16
    %v90 = vrot.slane %v88, 5
    %v91 = vsel %vm67, %v86, %v90
    %v93 = vshrl.u32 %v19, 16
    %v95 = vrot.slane %v93, 4
    %v96 = vshll.u32 %v19, 16
    %v98 = vrot.slane %v96, 5
    %v99 = vor.u32 %v95, %v98
    %v100 = vrot.slane %v99, 4
    %v102 = vshll.u32 %v20, 16
    %v104 = vrot.slane %v102, 5
    %v105 = vsel %vm67, %v100, %v104
    %v106 = vshrl.u32 %v20, 16
    %v108 = vrot.slane %v106, 4
    %v109 = vor.u32 %v108, %v104
    %v110 = vrot.slane %v109, 4
    %v112 = vshll.u32 %v21, 16
    %v114 = vrot.slane %v112, 5
    %v115 = vsel %vm67, %v110, %v114
    %v117 = vshrl.u32 %v22, 16
    %v119 = vrot.slane %v117, 4
    %v120 = vshll.u32 %v22, 16
    %v122 = vrot.slane %v120, 5
    %v123 = vor.u32 %v119, %v122
    %v124 = vrot.slane %v123, 4
    %v126 = vshll.u32 %v23, 16
    %v128 = vrot.slane %v126, 5
    %v129 = vsel %vm67, %v124, %v128
    %v130 = vshrl.u32 %v23, 16
    %v132 = vrot.slane %v130, 4
    %v133 = vor.u32 %v132, %v128
    %v134 = vrot.slane %v133, 4
    %v136 = vshll.u32 %v24, 16
    %v138 = vrot.slane %v136, 5
    %v139 = vsel %vm67, %v134, %v138
    %v141 = vshrl.u32 %v25, 16
    %v143 = vrot.slane %v141, 4
    %v144 = vshll.u32 %v25, 16
    %v146 = vrot.slane %v144, 5
    %v147 = vor.u32 %v143, %v146
    %v148 = vrot.slane %v147, 4
    %v150 = vshll.u32 %v26, 16
    %v152 = vrot.slane %v150, 5
    %v153 = vsel %vm67, %v148, %v152
    %v154 = vshrl.u32 %v26, 16
    %v156 = vrot.slane %v154, 4
    %v157 = vor.u32 %v156, %v152
    %v158 = vrot.slane %v157, 4
    %v160 = vshll.u32 %v27, 16
    %v162 = vrot.slane %v160, 5
    %v163 = vsel %vm67, %v158, %v162
    %v165 = vshrl.u32 %v28, 16
    %v167 = vrot.slane %v165, 4
    %v168 = vshll.u32 %v28, 16
    %v170 = vrot.slane %v168, 5
    %v171 = vor.u32 %v167, %v170
    %v172 = vrot.slane %v171, 4
    %v174 = vshll.u32 %v29, 16
    %v176 = vrot.slane %v174, 5
    %v177 = vsel %vm67, %v172, %v176
    %v178 = vshrl.u32 %v29, 16
    %v180 = vrot.slane %v178, 4
    %v181 = vor.u32 %v180, %v176
    %v182 = vrot.slane %v181, 4
    %v184 = vshll.u32 %v30, 16
    %v186 = vrot.slane %v184, 5
    %v187 = vsel %vm67, %v182, %v186
    %v189 = vshrl.u32 %v31, 16
    %v191 = vrot.slane %v189, 4
    %v192 = vshll.u32 %v31, 16
    %v194 = vrot.slane %v192, 5
    %v195 = vor.u32 %v191, %v194
    %v196 = vrot.slane %v195, 4
    %v198 = vshll.u32 %v32, 16
    %v200 = vrot.slane %v198, 5
    %v201 = vsel %vm67, %v196, %v200
    %v202 = vshrl.u32 %v32, 16
    %v204 = vrot.slane %v202, 4
    %v205 = vor.u32 %v204, %v200
    %v206 = vrot.slane %v205, 4
    %v208 = vshll.u32 %v33, 16
    %v210 = vrot.slane %v208, 5
    %v211 = vsel %vm67, %v206, %v210
    %v213 = vshrl.u32 %v34, 16
    %v215 = vrot.slane %v213, 4
    %v216 = vshll.u32 %v34, 16
    %v218 = vrot.slane %v216, 5
    %v219 = vor.u32 %v215, %v218
    %v220 = vrot.slane %v219, 4
    %v222 = vshll.u32 %v35, 16
    %v224 = vrot.slane %v222, 5
    %v225 = vsel %vm67, %v220, %v224
    %v226 = vshrl.u32 %v35, 16
    %v228 = vrot.slane %v226, 4
    %v229 = vor.u32 %v228, %v224
    %v230 = vrot.slane %v229, 4
    %v232 = vshll.u32 %v36, 16
    %v234 = vrot.slane %v232, 5
    %v235 = vsel %vm67, %v230, %v234
    %v237 = vshrl.u32 %v37, 16
    %v239 = vrot.slane %v237, 4
    %v240 = vshll.u32 %v37, 16
    %v242 = vrot.slane %v240, 5
    %v243 = vor.u32 %v239, %v242
    %v244 = vrot.slane %v243, 4
    %v246 = vshll.u32 %v38, 16
    %v248 = vrot.slane %v246, 5
    %v249 = vsel %vm67, %v244, %v248
    %v250 = vshrl.u32 %v38, 16
    %v252 = vrot.slane %v250, 4
    %v253 = vor.u32 %v252, %v248
    %v254 = vrot.slane %v253, 4
    %v256 = vshll.u32 %v39, 16
    %v258 = vrot.slane %v256, 5
    %v259 = vsel %vm67, %v254, %v258
    %v261 = vshrl.u32 %v40, 16
    %v263 = vrot.slane %v261, 4
    %v264 = vshll.u32 %v40, 16
    %v266 = vrot.slane %v264, 5
    %v267 = vor.u32 %v263, %v266
    %v268 = vrot.slane %v267, 4
    %v270 = vshll.u32 %v41, 16
    %v272 = vrot.slane %v270, 5
    %v273 = vsel %vm67, %v268, %v272
    %v274 = vshrl.u32 %v41, 16
    %v276 = vrot.slane %v274, 4
    %v277 = vor.u32 %v276, %v272
    %v278 = vrot.slane %v277, 4
    %v280 = vshll.u32 %v42, 16
    %v282 = vrot.slane %v280, 5
    %v283 = vsel %vm67, %v278, %v282
    %v285 = vshrl.u32 %v43, 16
    %v287 = vrot.slane %v285, 4
    %v288 = vshll.u32 %v43, 16
    %v290 = vrot.slane %v288, 5
    %v291 = vor.u32 %v287, %v290
    %v292 = vrot.slane %v291, 4
    %v294 = vshll.u32 %v44, 16
    %v296 = vrot.slane %v294, 5
    %v297 = vsel %vm67, %v292, %v296
    %v298 = vshrl.u32 %v44, 16
    %v300 = vrot.slane %v298, 4
    %v301 = vor.u32 %v300, %v296
    %v302 = vrot.slane %v301, 4
    %v304 = vshll.u32 %v45, 16
    %v306 = vrot.slane %v304, 5
    %v307 = vsel %vm67, %v302, %v306
    %v309 = vshrl.u32 %v46, 16
    %v311 = vrot.slane %v309, 4
    %v312 = vshll.u32 %v46, 16
    %v314 = vrot.slane %v312, 5
    %v315 = vor.u32 %v311, %v314
    %v316 = vrot.slane %v315, 4
    %v318 = vshll.u32 %v47, 16
    %v320 = vrot.slane %v318, 5
    %v321 = vsel %vm67, %v316, %v320
    %v322 = vshrl.u32 %v47, 16
    %v324 = vrot.slane %v322, 4
    %v325 = vor.u32 %v324, %v320
    %v326 = vrot.slane %v325, 4
    %v328 = vshll.u32 %v48, 16
    %v330 = vrot.slane %v328, 5
    %v331 = vsel %vm67, %v326, %v330
    %v333 = vshrl.u32 %v49, 16
    %v335 = vrot.slane %v333, 4
    %v336 = vshll.u32 %v49, 16
    %v338 = vrot.slane %v336, 5
    %v339 = vor.u32 %v335, %v338
    %v340 = vrot.slane %v339, 4
    %v342 = vshll.u32 %v50, 16
    %v344 = vrot.slane %v342, 5
    %v345 = vsel %vm67, %v340, %v344
    %v346 = vshrl.u32 %v50, 16
    %v348 = vrot.slane %v346, 4
    %v349 = vor.u32 %v348, %v344
    %v350 = vrot.slane %v349, 4
    %v352 = vshll.u32 %v51, 16
    %v354 = vrot.slane %v352, 5
    %v355 = vsel %vm67, %v350, %v354
    %v357 = vshrl.u32 %v52, 16
    %v359 = vrot.slane %v357, 4
    %v360 = vshll.u32 %v52, 16
    %v362 = vrot.slane %v360, 5
    %v363 = vor.u32 %v359, %v362
    %v364 = vrot.slane %v363, 4
    %v366 = vshll.u32 %v53, 16
    %v368 = vrot.slane %v366, 5
    %v369 = vsel %vm67, %v364, %v368
    %v370 = vshrl.u32 %v53, 16
    %v372 = vrot.slane %v370, 4
    %v373 = vor.u32 %v372, %v368
    %v374 = vrot.slane %v373, 4
    %v376 = vshll.u32 %v54, 16
    %v378 = vrot.slane %v376, 5
    %v379 = vsel %vm67, %v374, %v378
    %v381 = vshrl.u32 %v55, 16
    %v383 = vrot.slane %v381, 4
    %v384 = vshll.u32 %v55, 16
    %v386 = vrot.slane %v384, 5
    %v387 = vor.u32 %v383, %v386
    %v388 = vrot.slane %v387, 4
    %v390 = vshll.u32 %v56, 16
    %v392 = vrot.slane %v390, 5
    %v393 = vsel %vm67, %v388, %v392
    %v394 = vshrl.u32 %v56, 16
    %v396 = vrot.slane %v394, 4
    %v397 = vor.u32 %v396, %v392
    %v398 = vrot.slane %v397, 4
    %v400 = vshll.u32 %v57, 16
    %v402 = vrot.slane %v400, 5
    %v403 = vsel %vm67, %v398, %v402
    %v405 = vshrl.u32 %v58, 16
    %v407 = vrot.slane %v405, 4
    %v408 = vshll.u32 %v58, 16
    %v410 = vrot.slane %v408, 5
    %v411 = vor.u32 %v407, %v410
    %v412 = vrot.slane %v411, 4
    %v414 = vshll.u32 %v59, 16
    %v416 = vrot.slane %v414, 5
    %v417 = vsel %vm67, %v412, %v416
    %v418 = vshrl.u32 %v59, 16
    %v420 = vrot.slane %v418, 4
    %v421 = vor.u32 %v420, %v416
    %v422 = vrot.slane %v421, 4
    %v424 = vshll.u32 %v60, 16
    %v426 = vrot.slane %v424, 5
    %v427 = vsel %vm67, %v422, %v426
    %v429 = vshrl.u32 %v61, 16
    %v431 = vrot.slane %v429, 4
    %v432 = vshll.u32 %v61, 16
    %v434 = vrot.slane %v432, 5
    %v435 = vor.u32 %v431, %v434
    %v436 = vrot.slane %v435, 4
    %v438 = vshll.u32 %v62, 16
    %v440 = vrot.slane %v438, 5
    %v441 = vsel %vm67, %v436, %v440
    %v442 = vshrl.u32 %v62, 16
    %v444 = vrot.slane %v442, 4
    %v445 = vor.u32 %v444, %v440
    %v446 = vrot.slane %v445, 4
    %v448 = vshll.u32 %v63, 16
    %v450 = vrot.slane %v448, 5
    %v451 = vsel %vm67, %v446, %v450
    %s452 = scalar_lea.vmem %s1, 2
    %v453 = vld [vmem:[%s452] sm:$0x3]
    %v454 = vunpack.c.l.b16 %v81
    %v455 = vunpack.c.l.b16 %v91
    %v456 = vunpack.c.l.b16 %v105
    %v457 = vunpack.c.l.b16 %v115
    %v458 = vunpack.c.l.b16 %v129
    %v459 = vunpack.c.l.b16 %v139
    %v460 = vunpack.c.l.b16 %v153
    %v461 = vunpack.c.l.b16 %v163
    %v462 = vunpack.c.l.b16 %v177
    %v463 = vunpack.c.l.b16 %v187
    %v464 = vunpack.c.l.b16 %v201
    %v465 = vunpack.c.l.b16 %v211
    %v466 = vunpack.c.l.b16 %v225
    %v467 = vunpack.c.l.b16 %v235
    %v468 = vunpack.c.l.b16 %v249
    %v469 = vunpack.c.l.b16 %v259
    %v470 = vunpack.c.l.b16 %v273
    %v471 = vunpack.c.l.b16 %v283
    %v472 = vunpack.c.l.b16 %v297
    %v473 = vunpack.c.l.b16 %v307
    %v474 = vunpack.c.l.b16 %v321
    %v475 = vunpack.c.l.b16 %v331
    %v476 = vunpack.c.l.b16 %v345
    %v477 = vunpack.c.l.b16 %v355
    %v478 = vunpack.c.l.b16 %v369
    %v479 = vunpack.c.l.b16 %v379
    %v480 = vunpack.c.l.b16 %v393
    %v481 = vunpack.c.l.b16 %v403
    %v482 = vunpack.c.l.b16 %v417
    %v483 = vunpack.c.l.b16 %v427
    %v484 = vunpack.c.l.b16 %v441
    %v485 = vunpack.c.l.b16 %v451
    %v486 = vpack.c.b16 %v455, %v454
    %v487 = vpack.c.b16 %v457, %v456
    %v488 = vpack.c.b16 %v459, %v458
    %v489 = vpack.c.b16 %v461, %v460
    %v490 = vpack.c.b16 %v463, %v462
    %v491 = vpack.c.b16 %v465, %v464
    %v492 = vpack.c.b16 %v467, %v466
    %v493 = vpack.c.b16 %v469, %v468
    %v494 = vpack.c.b16 %v471, %v470
    %v495 = vpack.c.b16 %v473, %v472
    %v496 = vpack.c.b16 %v475, %v474
    %v497 = vpack.c.b16 %v477, %v476
    %v498 = vpack.c.b16 %v479, %v478
    %v499 = vpack.c.b16 %v481, %v480
    %v500 = vpack.c.b16 %v483, %v482
    %v501 = vpack.c.b16 %v485, %v484
    %vm502 = vcmask 31744
    %v504 = vsel %vm502, %v486, 0
    %v507 = vsel %vm502, %v487, 0
    %v510 = vsel %vm502, %v488, 0
    %v513 = vsel %vm502, %v489, 0
    %v516 = vsel %vm502, %v490, 0
    %v519 = vsel %vm502, %v491, 0
    %v522 = vsel %vm502, %v492, 0
    %v525 = vsel %vm502, %v493, 0
    %v528 = vsel %vm502, %v494, 0
    %v531 = vsel %vm502, %v495, 0
    %v534 = vsel %vm502, %v496, 0
    %v537 = vsel %vm502, %v497, 0
    %v540 = vsel %vm502, %v498, 0
    %v543 = vsel %vm502, %v499, 0
    %v546 = vsel %vm502, %v500, 0
    %v549 = vsel %vm502, %v501, 0
    %vm551 = vcmask 1041408
    %v553 = vsel %vm551, %v453, 0
    %555 = vmatprep.subr.bf16.mxu0 0
    %556 = vmatpush1.bf16.msra.mxu0 0
    %557 = vmatprep.subr.bf16.mxu0 0
    %558 = vmatpush1.bf16.msra.mxu0 0
    %559 = vmatprep.subr.bf16.mxu0 0
    %560 = vmatpush1.bf16.msra.mxu0 0
    %561 = vmatprep.subr.bf16.mxu0 0
    %562 = vmatpush1.bf16.msra.mxu0 0
    %563 = vmatprep.subr.bf16.mxu0 0
    %564 = vmatpush1.bf16.msra.mxu0 0
    %565 = vmatprep.subr.bf16.mxu0 0
    %566 = vmatpush1.bf16.msra.mxu0 0
    %567 = vmatprep.subr.bf16.mxu0 0
    %568 = vmatpush1.bf16.msra.mxu0 0
    %569 = vmatprep.subr.bf16.mxu0 0
    %570 = vmatpush1.bf16.msra.mxu0 %v553
    %571 = vmatprep.subr.bf16.mxu0 0
    %572 = vmatpush2.bf16.msra.mxu0 0
    %573 = vmatprep.subr.bf16.mxu0 0
    %574 = vmatpush2.bf16.msra.mxu0 0
    %575 = vmatprep.subr.bf16.mxu0 0
    %576 = vmatpush2.bf16.msra.mxu0 0
    %577 = vmatprep.subr.bf16.mxu0 0
    %578 = vmatpush2.bf16.msra.mxu0 0
    %579 = vmatprep.subr.bf16.mxu0 0
    %580 = vmatpush2.bf16.msra.mxu0 0
    %581 = vmatprep.subr.bf16.mxu0 0
    %582 = vmatpush2.bf16.msra.mxu0 0
    %583 = vmatprep.subr.bf16.mxu0 0
    %584 = vmatpush2.bf16.msra.mxu0 0
    %585 = vmatprep.subr.bf16.mxu0 0
    %586 = vmatpush2.bf16.msra.mxu0 0
    %587 = vmatprep.mubr.bf16.mxu0 0
    %588 = vmatmul.mubr.bf16.gmra.mxu0 %v504
    %v589 = vpop.f32.mrf.mxu0
    %v590 = vadd.f32 0.0, %v589
    %v591 = vpop.f32.mrf.mxu0
    %v592 = vpop.f32.mrf.mxu0
    %v593 = vadd.f32 0.0, %v592
    %v594 = vpop.f32.mrf.mxu0
    %595 = vmatprep.mubr.bf16.mxu0 0
    %596 = vmatmul.mubr.bf16.gmra.mxu0 %v507
    %v597 = vpop.f32.mrf.mxu0
    %v598 = vadd.f32 0.0, %v597
    %v599 = vpop.f32.mrf.mxu0
    %v600 = vpop.f32.mrf.mxu0
    %v601 = vadd.f32 0.0, %v600
    %v602 = vpop.f32.mrf.mxu0
    %603 = vmatprep.mubr.bf16.mxu0 0
    %604 = vmatmul.mubr.bf16.gmra.mxu0 %v510
    %v605 = vpop.f32.mrf.mxu0
    %v606 = vadd.f32 0.0, %v605
    %v607 = vpop.f32.mrf.mxu0
    %v608 = vpop.f32.mrf.mxu0
    %v609 = vadd.f32 0.0, %v608
    %v610 = vpop.f32.mrf.mxu0
    %611 = vmatprep.mubr.bf16.mxu0 0
    %612 = vmatmul.mubr.bf16.gmra.mxu0 %v513
    %v613 = vpop.f32.mrf.mxu0
    %v614 = vadd.f32 0.0, %v613
    %v615 = vpop.f32.mrf.mxu0
    %v616 = vpop.f32.mrf.mxu0
    %v617 = vadd.f32 0.0, %v616
    %v618 = vpop.f32.mrf.mxu0
    %619 = vmatprep.mubr.bf16.mxu0 0
    %620 = vmatmul.mubr.bf16.gmra.mxu0 %v516
    %v621 = vpop.f32.mrf.mxu0
    %v622 = vadd.f32 0.0, %v621
    %v623 = vpop.f32.mrf.mxu0
    %v624 = vpop.f32.mrf.mxu0
    %v625 = vadd.f32 0.0, %v624
    %v626 = vpop.f32.mrf.mxu0
    %627 = vmatprep.mubr.bf16.mxu0 0
    %628 = vmatmul.mubr.bf16.gmra.mxu0 %v519
    %v629 = vpop.f32.mrf.mxu0
    %v630 = vadd.f32 0.0, %v629
    %v631 = vpop.f32.mrf.mxu0
    %v632 = vpop.f32.mrf.mxu0
    %v633 = vadd.f32 0.0, %v632
    %v634 = vpop.f32.mrf.mxu0
    %635 = vmatprep.mubr.bf16.mxu0 0
    %636 = vmatmul.mubr.bf16.gmra.mxu0 %v522
    %v637 = vpop.f32.mrf.mxu0
    %v638 = vadd.f32 0.0, %v637
    %v639 = vpop.f32.mrf.mxu0
    %v640 = vpop.f32.mrf.mxu0
    %v641 = vadd.f32 0.0, %v640
    %v642 = vpop.f32.mrf.mxu0
    %643 = vmatprep.mubr.bf16.mxu0 0
    %644 = vmatmul.mubr.bf16.gmra.mxu0 %v525
    %v645 = vpop.f32.mrf.mxu0
    %v646 = vadd.f32 0.0, %v645
    %v647 = vpop.f32.mrf.mxu0
    %v648 = vpop.f32.mrf.mxu0
    %v649 = vadd.f32 0.0, %v648
    %v650 = vpop.f32.mrf.mxu0
    %651 = vmatprep.mubr.bf16.mxu0 0
    %652 = vmatmul.mubr.bf16.gmra.mxu0 %v528
    %v653 = vpop.f32.mrf.mxu0
    %v654 = vadd.f32 0.0, %v653
    %v655 = vpop.f32.mrf.mxu0
    %v656 = vpop.f32.mrf.mxu0
    %v657 = vadd.f32 0.0, %v656
    %v658 = vpop.f32.mrf.mxu0
    %659 = vmatprep.mubr.bf16.mxu0 0
    %660 = vmatmul.mubr.bf16.gmra.mxu0 %v531
    %v661 = vpop.f32.mrf.mxu0
    %v662 = vadd.f32 0.0, %v661
    %v663 = vpop.f32.mrf.mxu0
    %v664 = vpop.f32.mrf.mxu0
    %v665 = vadd.f32 0.0, %v664
    %v666 = vpop.f32.mrf.mxu0
    %667 = vmatprep.mubr.bf16.mxu0 0
    %668 = vmatmul.mubr.bf16.gmra.mxu0 %v534
    %v669 = vpop.f32.mrf.mxu0
    %v670 = vadd.f32 0.0, %v669
    %v671 = vpop.f32.mrf.mxu0
    %v672 = vpop.f32.mrf.mxu0
    %v673 = vadd.f32 0.0, %v672
    %v674 = vpop.f32.mrf.mxu0
    %675 = vmatprep.mubr.bf16.mxu0 0
    %676 = vmatmul.mubr.bf16.gmra.mxu0 %v537
    %v677 = vpop.f32.mrf.mxu0
    %v678 = vadd.f32 0.0, %v677
    %v679 = vpop.f32.mrf.mxu0
    %v680 = vpop.f32.mrf.mxu0
    %v681 = vadd.f32 0.0, %v680
    %v682 = vpop.f32.mrf.mxu0
    %683 = vmatprep.mubr.bf16.mxu0 0
    %684 = vmatmul.mubr.bf16.gmra.mxu0 %v540
    %v685 = vpop.f32.mrf.mxu0
    %v686 = vadd.f32 0.0, %v685
    %v687 = vpop.f32.mrf.mxu0
    %v688 = vpop.f32.mrf.mxu0
    %v689 = vadd.f32 0.0, %v688
    %v690 = vpop.f32.mrf.mxu0
    %691 = vmatprep.mubr.bf16.mxu0 0
    %692 = vmatmul.mubr.bf16.gmra.mxu0 %v543
    %v693 = vpop.f32.mrf.mxu0
    %v694 = vadd.f32 0.0, %v693
    %v695 = vpop.f32.mrf.mxu0
    %v696 = vpop.f32.mrf.mxu0
    %v697 = vadd.f32 0.0, %v696
    %v698 = vpop.f32.mrf.mxu0
    %699 = vmatprep.mubr.bf16.mxu0 0
    %700 = vmatmul.mubr.bf16.gmra.mxu0 %v546
    %v701 = vpop.f32.mrf.mxu0
    %v702 = vadd.f32 0.0, %v701
    %v703 = vpop.f32.mrf.mxu0
    %v704 = vpop.f32.mrf.mxu0
    %v705 = vadd.f32 0.0, %v704
    %v706 = vpop.f32.mrf.mxu0
    %707 = vmatprep.mubr.bf16.mxu0 0
    %708 = vmatmul.mubr.bf16.gmra.mxu0 %v549
    %v709 = vpop.f32.mrf.mxu0
    %v710 = vadd.f32 0.0, %v709
    %v711 = vpop.f32.mrf.mxu0
    %v712 = vpop.f32.mrf.mxu0
    %v713 = vadd.f32 0.0, %v712
    %v714 = vpop.f32.mrf.mxu0
    %715 = vdwg.mxu0
    %v748 = vunpack.c.l.b16 %v16
    %v749 = vunpack.c.l.b16 %v17
    %v750 = vunpack.c.l.b16 %v19
    %v751 = vunpack.c.l.b16 %v20
    %v752 = vunpack.c.l.b16 %v22
    %v753 = vunpack.c.l.b16 %v23
    %v754 = vunpack.c.l.b16 %v25
    %v755 = vunpack.c.l.b16 %v26
    %v756 = vunpack.c.l.b16 %v28
    %v757 = vunpack.c.l.b16 %v29
    %v758 = vunpack.c.l.b16 %v31
    %v759 = vunpack.c.l.b16 %v32
    %v760 = vunpack.c.l.b16 %v34
    %v761 = vunpack.c.l.b16 %v35
    %v762 = vunpack.c.l.b16 %v37
    %v763 = vunpack.c.l.b16 %v38
    %v764 = vunpack.c.l.b16 %v40
    %v765 = vunpack.c.l.b16 %v41
    %v766 = vunpack.c.l.b16 %v43
    %v767 = vunpack.c.l.b16 %v44
    %v768 = vunpack.c.l.b16 %v46
    %v769 = vunpack.c.l.b16 %v47
    %v770 = vunpack.c.l.b16 %v49
    %v771 = vunpack.c.l.b16 %v50
    %v772 = vunpack.c.l.b16 %v52
    %v773 = vunpack.c.l.b16 %v53
    %v774 = vunpack.c.l.b16 %v55
    %v775 = vunpack.c.l.b16 %v56
    %v776 = vunpack.c.l.b16 %v58
    %v777 = vunpack.c.l.b16 %v59
    %v778 = vunpack.c.l.b16 %v61
    %v779 = vunpack.c.l.b16 %v62
    %v780 = vpack.c.b16 %v749, %v748
    %v781 = vpack.c.b16 %v751, %v750
    %v782 = vpack.c.b16 %v753, %v752
    %v783 = vpack.c.b16 %v755, %v754
    %v784 = vpack.c.b16 %v757, %v756
    %v785 = vpack.c.b16 %v759, %v758
    %v786 = vpack.c.b16 %v761, %v760
    %v787 = vpack.c.b16 %v763, %v762
    %v788 = vpack.c.b16 %v765, %v764
    %v789 = vpack.c.b16 %v767, %v766
    %v790 = vpack.c.b16 %v769, %v768
    %v791 = vpack.c.b16 %v771, %v770
    %v792 = vpack.c.b16 %v773, %v772
    %v793 = vpack.c.b16 %v775, %v774
    %v794 = vpack.c.b16 %v777, %v776
    %v795 = vpack.c.b16 %v779, %v778
    %v797 = vsel %vm502, %v780, 0
    %v800 = vsel %vm502, %v781, 0
    %v803 = vsel %vm502, %v782, 0
    %v806 = vsel %vm502, %v783, 0
    %v809 = vsel %vm502, %v784, 0
    %v812 = vsel %vm502, %v785, 0
    %v815 = vsel %vm502, %v786, 0
    %v818 = vsel %vm502, %v787, 0
    %v821 = vsel %vm502, %v788, 0
    %v824 = vsel %vm502, %v789, 0
    %v827 = vsel %vm502, %v790, 0
    %v830 = vsel %vm502, %v791, 0
    %v833 = vsel %vm502, %v792, 0
    %v836 = vsel %vm502, %v793, 0
    %v839 = vsel %vm502, %v794, 0
    %v842 = vsel %vm502, %v795, 0
    %v845 = vsel %vm551, %v64, 0
    %847 = vmatprep.subr.bf16.mxu0 0
    %848 = vmatpush1.bf16.msra.mxu0 0
    %849 = vmatprep.subr.bf16.mxu0 0
    %850 = vmatpush1.bf16.msra.mxu0 0
    %851 = vmatprep.subr.bf16.mxu0 0
    %852 = vmatpush1.bf16.msra.mxu0 0
    %853 = vmatprep.subr.bf16.mxu0 0
    %854 = vmatpush1.bf16.msra.mxu0 0
    %855 = vmatprep.subr.bf16.mxu0 0
    %856 = vmatpush1.bf16.msra.mxu0 0
    %857 = vmatprep.subr.bf16.mxu0 0
    %858 = vmatpush1.bf16.msra.mxu0 0
    %859 = vmatprep.subr.bf16.mxu0 0
    %860 = vmatpush1.bf16.msra.mxu0 0
    %861 = vmatprep.subr.bf16.mxu0 0
    %862 = vmatpush1.bf16.msra.mxu0 %v845
    %863 = vmatprep.subr.bf16.mxu0 0
    %864 = vmatpush2.bf16.msra.mxu0 0
    %865 = vmatprep.subr.bf16.mxu0 0
    %866 = vmatpush2.bf16.msra.mxu0 0
    %867 = vmatprep.subr.bf16.mxu0 0
    %868 = vmatpush2.bf16.msra.mxu0 0
    %869 = vmatprep.subr.bf16.mxu0 0
    %870 = vmatpush2.bf16.msra.mxu0 0
    %871 = vmatprep.subr.bf16.mxu0 0
    %872 = vmatpush2.bf16.msra.mxu0 0
    %873 = vmatprep.subr.bf16.mxu0 0
    %874 = vmatpush2.bf16.msra.mxu0 0
    %875 = vmatprep.subr.bf16.mxu0 0
    %876 = vmatpush2.bf16.msra.mxu0 0
    %877 = vmatprep.subr.bf16.mxu0 0
    %878 = vmatpush2.bf16.msra.mxu0 0
    %879 = vmatprep.mubr.bf16.mxu0 0
    %880 = vmatmul.mubr.bf16.gmra.mxu0 %v797
    %v881 = vpop.f32.mrf.mxu0
    %v882 = vadd.f32 %v590, %v881
    %v883 = vpop.f32.mrf.mxu0
    %v884 = vpop.f32.mrf.mxu0
    %v885 = vadd.f32 %v593, %v884
    %v886 = vpop.f32.mrf.mxu0
    %887 = vmatprep.mubr.bf16.mxu0 0
    %888 = vmatmul.mubr.bf16.gmra.mxu0 %v800
    %v889 = vpop.f32.mrf.mxu0
    %v890 = vadd.f32 %v598, %v889
    %v891 = vpop.f32.mrf.mxu0
    %v892 = vpop.f32.mrf.mxu0
    %v893 = vadd.f32 %v601, %v892
    %v894 = vpop.f32.mrf.mxu0
    %895 = vmatprep.mubr.bf16.mxu0 0
    %896 = vmatmul.mubr.bf16.gmra.mxu0 %v803
    %v897 = vpop.f32.mrf.mxu0
    %v898 = vadd.f32 %v606, %v897
    %v899 = vpop.f32.mrf.mxu0
    %v900 = vpop.f32.mrf.mxu0
    %v901 = vadd.f32 %v609, %v900
    %v902 = vpop.f32.mrf.mxu0
    %903 = vmatprep.mubr.bf16.mxu0 0
    %904 = vmatmul.mubr.bf16.gmra.mxu0 %v806
    %v905 = vpop.f32.mrf.mxu0
    %v906 = vadd.f32 %v614, %v905
    %v907 = vpop.f32.mrf.mxu0
    %v908 = vpop.f32.mrf.mxu0
    %v909 = vadd.f32 %v617, %v908
    %v910 = vpop.f32.mrf.mxu0
    %911 = vmatprep.mubr.bf16.mxu0 0
    %912 = vmatmul.mubr.bf16.gmra.mxu0 %v809
    %v913 = vpop.f32.mrf.mxu0
    %v914 = vadd.f32 %v622, %v913
    %v915 = vpop.f32.mrf.mxu0
    %v916 = vpop.f32.mrf.mxu0
    %v917 = vadd.f32 %v625, %v916
    %v918 = vpop.f32.mrf.mxu0
    %919 = vmatprep.mubr.bf16.mxu0 0
    %920 = vmatmul.mubr.bf16.gmra.mxu0 %v812
    %v921 = vpop.f32.mrf.mxu0
    %v922 = vadd.f32 %v630, %v921
    %v923 = vpop.f32.mrf.mxu0
    %v924 = vpop.f32.mrf.mxu0
    %v925 = vadd.f32 %v633, %v924
    %v926 = vpop.f32.mrf.mxu0
    %927 = vmatprep.mubr.bf16.mxu0 0
    %928 = vmatmul.mubr.bf16.gmra.mxu0 %v815
    %v929 = vpop.f32.mrf.mxu0
    %v930 = vadd.f32 %v638, %v929
    %v931 = vpop.f32.mrf.mxu0
    %v932 = vpop.f32.mrf.mxu0
    %v933 = vadd.f32 %v641, %v932
    %v934 = vpop.f32.mrf.mxu0
    %935 = vmatprep.mubr.bf16.mxu0 0
    %936 = vmatmul.mubr.bf16.gmra.mxu0 %v818
    %v937 = vpop.f32.mrf.mxu0
    %v938 = vadd.f32 %v646, %v937
    %v939 = vpop.f32.mrf.mxu0
    %v940 = vpop.f32.mrf.mxu0
    %v941 = vadd.f32 %v649, %v940
    %v942 = vpop.f32.mrf.mxu0
    %943 = vmatprep.mubr.bf16.mxu0 0
    %944 = vmatmul.mubr.bf16.gmra.mxu0 %v821
    %v945 = vpop.f32.mrf.mxu0
    %v946 = vadd.f32 %v654, %v945
    %v947 = vpop.f32.mrf.mxu0
    %v948 = vpop.f32.mrf.mxu0
    %v949 = vadd.f32 %v657, %v948
    %v950 = vpop.f32.mrf.mxu0
    %951 = vmatprep.mubr.bf16.mxu0 0
    %952 = vmatmul.mubr.bf16.gmra.mxu0 %v824
    %v953 = vpop.f32.mrf.mxu0
    %v954 = vadd.f32 %v662, %v953
    %v955 = vpop.f32.mrf.mxu0
    %v956 = vpop.f32.mrf.mxu0
    %v957 = vadd.f32 %v665, %v956
    %v958 = vpop.f32.mrf.mxu0
    %959 = vmatprep.mubr.bf16.mxu0 0
    %960 = vmatmul.mubr.bf16.gmra.mxu0 %v827
    %v961 = vpop.f32.mrf.mxu0
    %v962 = vadd.f32 %v670, %v961
    %v963 = vpop.f32.mrf.mxu0
    %v964 = vpop.f32.mrf.mxu0
    %v965 = vadd.f32 %v673, %v964
    %v966 = vpop.f32.mrf.mxu0
    %967 = vmatprep.mubr.bf16.mxu0 0
    %968 = vmatmul.mubr.bf16.gmra.mxu0 %v830
    %v969 = vpop.f32.mrf.mxu0
    %v970 = vadd.f32 %v678, %v969
    %v971 = vpop.f32.mrf.mxu0
    %v972 = vpop.f32.mrf.mxu0
    %v973 = vadd.f32 %v681, %v972
    %v974 = vpop.f32.mrf.mxu0
    %975 = vmatprep.mubr.bf16.mxu0 0
    %976 = vmatmul.mubr.bf16.gmra.mxu0 %v833
    %v977 = vpop.f32.mrf.mxu0
    %v978 = vadd.f32 %v686, %v977
    %v979 = vpop.f32.mrf.mxu0
    %v980 = vpop.f32.mrf.mxu0
    %v981 = vadd.f32 %v689, %v980
    %v982 = vpop.f32.mrf.mxu0
    %983 = vmatprep.mubr.bf16.mxu0 0
    %984 = vmatmul.mubr.bf16.gmra.mxu0 %v836
    %v985 = vpop.f32.mrf.mxu0
    %v986 = vadd.f32 %v694, %v985
    %v987 = vpop.f32.mrf.mxu0
    %v988 = vpop.f32.mrf.mxu0
    %v989 = vadd.f32 %v697, %v988
    %v990 = vpop.f32.mrf.mxu0
    %991 = vmatprep.mubr.bf16.mxu0 0
    %992 = vmatmul.mubr.bf16.gmra.mxu0 %v839
    %v993 = vpop.f32.mrf.mxu0
    %v994 = vadd.f32 %v702, %v993
    %v995 = vpop.f32.mrf.mxu0
    %v996 = vpop.f32.mrf.mxu0
    %v997 = vadd.f32 %v705, %v996
    %v998 = vpop.f32.mrf.mxu0
    %999 = vmatprep.mubr.bf16.mxu0 0
    %1000 = vmatmul.mubr.bf16.gmra.mxu0 %v842
    %v1001 = vpop.f32.mrf.mxu0
    %v1002 = vadd.f32 %v710, %v1001
    %v1003 = vpop.f32.mrf.mxu0
    %v1004 = vpop.f32.mrf.mxu0
    %v1005 = vadd.f32 %v713, %v1004
    %v1006 = vpop.f32.mrf.mxu0
    %1007 = vdwg.mxu0
    %vm1024 = vcmask 1042432
    %vm1025 = vcmask 1046532
    %vm1026 = vmor %vm1024, %vm1025
    %v1027 = vrot.slane %v16, 5
    %v1028 = vrot.slane %v1027, 4
    %v1029 = vrot.slane %v17, 5
    %v1030 = vsel %vm1026, %v1028, %v1029
    %v1031 = vrot.slane %v1029, 4
    %v1032 = vrot.slane %v18, 5
    %v1033 = vsel %vm1026, %v1031, %v1032
    %v1034 = vrot.slane %v19, 5
    %v1035 = vrot.slane %v1034, 4
    %v1036 = vrot.slane %v20, 5
    %v1037 = vsel %vm1026, %v1035, %v1036
    %v1038 = vrot.slane %v1036, 4
    %v1039 = vrot.slane %v21, 5
    %v1040 = vsel %vm1026, %v1038, %v1039
    %v1041 = vrot.slane %v22, 5
    %v1042 = vrot.slane %v1041, 4
    %v1043 = vrot.slane %v23, 5
    %v1044 = vsel %vm1026, %v1042, %v1043
    %v1045 = vrot.slane %v1043, 4
    %v1046 = vrot.slane %v24, 5
    %v1047 = vsel %vm1026, %v1045, %v1046
    %v1048 = vrot.slane %v25, 5
    %v1049 = vrot.slane %v1048, 4
    %v1050 = vrot.slane %v26, 5
    %v1051 = vsel %vm1026, %v1049, %v1050
    %v1052 = vrot.slane %v1050, 4
    %v1053 = vrot.slane %v27, 5
    %v1054 = vsel %vm1026, %v1052, %v1053
    %v1055 = vrot.slane %v28, 5
    %v1056 = vrot.slane %v1055, 4
    %v1057 = vrot.slane %v29, 5
    %v1058 = vsel %vm1026, %v1056, %v1057
    %v1059 = vrot.slane %v1057, 4
    %v1060 = vrot.slane %v30, 5
    %v1061 = vsel %vm1026, %v1059, %v1060
    %v1062 = vrot.slane %v31, 5
    %v1063 = vrot.slane %v1062, 4
    %v1064 = vrot.slane %v32, 5
    %v1065 = vsel %vm1026, %v1063, %v1064
    %v1066 = vrot.slane %v1064, 4
    %v1067 = vrot.slane %v33, 5
    %v1068 = vsel %vm1026, %v1066, %v1067
    %v1069 = vrot.slane %v34, 5
    %v1070 = vrot.slane %v1069, 4
    %v1071 = vrot.slane %v35, 5
    %v1072 = vsel %vm1026, %v1070, %v1071
    %v1073 = vrot.slane %v1071, 4
    %v1074 = vrot.slane %v36, 5
    %v1075 = vsel %vm1026, %v1073, %v1074
    %v1076 = vrot.slane %v37, 5
    %v1077 = vrot.slane %v1076, 4
    %v1078 = vrot.slane %v38, 5
    %v1079 = vsel %vm1026, %v1077, %v1078
    %v1080 = vrot.slane %v1078, 4
    %v1081 = vrot.slane %v39, 5
    %v1082 = vsel %vm1026, %v1080, %v1081
    %v1083 = vrot.slane %v40, 5
    %v1084 = vrot.slane %v1083, 4
    %v1085 = vrot.slane %v41, 5
    %v1086 = vsel %vm1026, %v1084, %v1085
    %v1087 = vrot.slane %v1085, 4
    %v1088 = vrot.slane %v42, 5
    %v1089 = vsel %vm1026, %v1087, %v1088
    %v1090 = vrot.slane %v43, 5
    %v1091 = vrot.slane %v1090, 4
    %v1092 = vrot.slane %v44, 5
    %v1093 = vsel %vm1026, %v1091, %v1092
    %v1094 = vrot.slane %v1092, 4
    %v1095 = vrot.slane %v45, 5
    %v1096 = vsel %vm1026, %v1094, %v1095
    %v1097 = vrot.slane %v46, 5
    %v1098 = vrot.slane %v1097, 4
    %v1099 = vrot.slane %v47, 5
    %v1100 = vsel %vm1026, %v1098, %v1099
    %v1101 = vrot.slane %v1099, 4
    %v1102 = vrot.slane %v48, 5
    %v1103 = vsel %vm1026, %v1101, %v1102
    %v1104 = vrot.slane %v49, 5
    %v1105 = vrot.slane %v1104, 4
    %v1106 = vrot.slane %v50, 5
    %v1107 = vsel %vm1026, %v1105, %v1106
    %v1108 = vrot.slane %v1106, 4
    %v1109 = vrot.slane %v51, 5
    %v1110 = vsel %vm1026, %v1108, %v1109
    %v1111 = vrot.slane %v52, 5
    %v1112 = vrot.slane %v1111, 4
    %v1113 = vrot.slane %v53, 5
    %v1114 = vsel %vm1026, %v1112, %v1113
    %v1115 = vrot.slane %v1113, 4
    %v1116 = vrot.slane %v54, 5
    %v1117 = vsel %vm1026, %v1115, %v1116
    %v1118 = vrot.slane %v55, 5
    %v1119 = vrot.slane %v1118, 4
    %v1120 = vrot.slane %v56, 5
    %v1121 = vsel %vm1026, %v1119, %v1120
    %v1122 = vrot.slane %v1120, 4
    %v1123 = vrot.slane %v57, 5
    %v1124 = vsel %vm1026, %v1122, %v1123
    %v1125 = vrot.slane %v58, 5
    %v1126 = vrot.slane %v1125, 4
    %v1127 = vrot.slane %v59, 5
    %v1128 = vsel %vm1026, %v1126, %v1127
    %v1129 = vrot.slane %v1127, 4
    %v1130 = vrot.slane %v60, 5
    %v1131 = vsel %vm1026, %v1129, %v1130
    %v1132 = vrot.slane %v61, 5
    %v1133 = vrot.slane %v1132, 4
    %v1134 = vrot.slane %v62, 5
    %v1135 = vsel %vm1026, %v1133, %v1134
    %v1136 = vrot.slane %v1134, 4
    %v1137 = vrot.slane %v63, 5
    %v1138 = vsel %vm1026, %v1136, %v1137
    %s1139 = scalar_lea.vmem %s1, 4
    %v1140 = vld [vmem:[%s1139] sm:$0x3]
    %v1141 = vunpack.c.l.b16 %v1030
    %v1142 = vunpack.c.l.b16 %v1033
    %v1143 = vunpack.c.l.b16 %v1037
    %v1144 = vunpack.c.l.b16 %v1040
    %v1145 = vunpack.c.l.b16 %v1044
    %v1146 = vunpack.c.l.b16 %v1047
    %v1147 = vunpack.c.l.b16 %v1051
    %v1148 = vunpack.c.l.b16 %v1054
    %v1149 = vunpack.c.l.b16 %v1058
    %v1150 = vunpack.c.l.b16 %v1061
    %v1151 = vunpack.c.l.b16 %v1065
    %v1152 = vunpack.c.l.b16 %v1068
    %v1153 = vunpack.c.l.b16 %v1072
    %v1154 = vunpack.c.l.b16 %v1075
    %v1155 = vunpack.c.l.b16 %v1079
    %v1156 = vunpack.c.l.b16 %v1082
    %v1157 = vunpack.c.l.b16 %v1086
    %v1158 = vunpack.c.l.b16 %v1089
    %v1159 = vunpack.c.l.b16 %v1093
    %v1160 = vunpack.c.l.b16 %v1096
    %v1161 = vunpack.c.l.b16 %v1100
    %v1162 = vunpack.c.l.b16 %v1103
    %v1163 = vunpack.c.l.b16 %v1107
    %v1164 = vunpack.c.l.b16 %v1110
    %v1165 = vunpack.c.l.b16 %v1114
    %v1166 = vunpack.c.l.b16 %v1117
    %v1167 = vunpack.c.l.b16 %v1121
    %v1168 = vunpack.c.l.b16 %v1124
    %v1169 = vunpack.c.l.b16 %v1128
    %v1170 = vunpack.c.l.b16 %v1131
    %v1171 = vunpack.c.l.b16 %v1135
    %v1172 = vunpack.c.l.b16 %v1138
    %v1173 = vpack.c.b16 %v1142, %v1141
    %v1174 = vpack.c.b16 %v1144, %v1143
    %v1175 = vpack.c.b16 %v1146, %v1145
    %v1176 = vpack.c.b16 %v1148, %v1147
    %v1177 = vpack.c.b16 %v1150, %v1149
    %v1178 = vpack.c.b16 %v1152, %v1151
    %v1179 = vpack.c.b16 %v1154, %v1153
    %v1180 = vpack.c.b16 %v1156, %v1155
    %v1181 = vpack.c.b16 %v1158, %v1157
    %v1182 = vpack.c.b16 %v1160, %v1159
    %v1183 = vpack.c.b16 %v1162, %v1161
    %v1184 = vpack.c.b16 %v1164, %v1163
    %v1185 = vpack.c.b16 %v1166, %v1165
    %v1186 = vpack.c.b16 %v1168, %v1167
    %v1187 = vpack.c.b16 %v1170, %v1169
    %v1188 = vpack.c.b16 %v1172, %v1171
    %v1190 = vsel %vm502, %v1173, 0
    %v1193 = vsel %vm502, %v1174, 0
    %v1196 = vsel %vm502, %v1175, 0
    %v1199 = vsel %vm502, %v1176, 0
    %v1202 = vsel %vm502, %v1177, 0
    %v1205 = vsel %vm502, %v1178, 0
    %v1208 = vsel %vm502, %v1179, 0
    %v1211 = vsel %vm502, %v1180, 0
    %v1214 = vsel %vm502, %v1181, 0
    %v1217 = vsel %vm502, %v1182, 0
    %v1220 = vsel %vm502, %v1183, 0
    %v1223 = vsel %vm502, %v1184, 0
    %v1226 = vsel %vm502, %v1185, 0
    %v1229 = vsel %vm502, %v1186, 0
    %v1232 = vsel %vm502, %v1187, 0
    %v1235 = vsel %vm502, %v1188, 0
    %v1238 = vsel %vm551, %v1140, 0
    %1240 = vmatprep.subr.bf16.mxu0 0
    %1241 = vmatpush1.bf16.msra.mxu0 0
    %1242 = vmatprep.subr.bf16.mxu0 0
    %1243 = vmatpush1.bf16.msra.mxu0 0
    %1244 = vmatprep.subr.bf16.mxu0 0
    %1245 = vmatpush1.bf16.msra.mxu0 0
    %1246 = vmatprep.subr.bf16.mxu0 0
    %1247 = vmatpush1.bf16.msra.mxu0 0
    %1248 = vmatprep.subr.bf16.mxu0 0
    %1249 = vmatpush1.bf16.msra.mxu0 0
    %1250 = vmatprep.subr.bf16.mxu0 0
    %1251 = vmatpush1.bf16.msra.mxu0 0
    %1252 = vmatprep.subr.bf16.mxu0 0
    %1253 = vmatpush1.bf16.msra.mxu0 0
    %1254 = vmatprep.subr.bf16.mxu0 0
    %1255 = vmatpush1.bf16.msra.mxu0 %v1238
    %1256 = vmatprep.subr.bf16.mxu0 0
    %1257 = vmatpush2.bf16.msra.mxu0 0
    %1258 = vmatprep.subr.bf16.mxu0 0
    %1259 = vmatpush2.bf16.msra.mxu0 0
    %1260 = vmatprep.subr.bf16.mxu0 0
    %1261 = vmatpush2.bf16.msra.mxu0 0
    %1262 = vmatprep.subr.bf16.mxu0 0
    %1263 = vmatpush2.bf16.msra.mxu0 0
    %1264 = vmatprep.subr.bf16.mxu0 0
    %1265 = vmatpush2.bf16.msra.mxu0 0
    %1266 = vmatprep.subr.bf16.mxu0 0
    %1267 = vmatpush2.bf16.msra.mxu0 0
    %1268 = vmatprep.subr.bf16.mxu0 0
    %1269 = vmatpush2.bf16.msra.mxu0 0
    %1270 = vmatprep.subr.bf16.mxu0 0
    %1271 = vmatpush2.bf16.msra.mxu0 0
    %1272 = vmatprep.mubr.bf16.mxu0 0
    %1273 = vmatmul.mubr.bf16.gmra.mxu0 %v1190
    %v1274 = vpop.f32.mrf.mxu0
    %v1275 = vadd.f32 0.0, %v1274
    %v1276 = vpop.f32.mrf.mxu0
    %v1277 = vpop.f32.mrf.mxu0
    %v1278 = vadd.f32 0.0, %v1277
    %v1279 = vpop.f32.mrf.mxu0
    %1280 = vmatprep.mubr.bf16.mxu0 0
    %1281 = vmatmul.mubr.bf16.gmra.mxu0 %v1193
    %v1282 = vpop.f32.mrf.mxu0
    %v1283 = vadd.f32 0.0, %v1282
    %v1284 = vpop.f32.mrf.mxu0
    %v1285 = vpop.f32.mrf.mxu0
    %v1286 = vadd.f32 0.0, %v1285
    %v1287 = vpop.f32.mrf.mxu0
    %1288 = vmatprep.mubr.bf16.mxu0 0
    %1289 = vmatmul.mubr.bf16.gmra.mxu0 %v1196
    %v1290 = vpop.f32.mrf.mxu0
    %v1291 = vadd.f32 0.0, %v1290
    %v1292 = vpop.f32.mrf.mxu0
    %v1293 = vpop.f32.mrf.mxu0
    %v1294 = vadd.f32 0.0, %v1293
    %v1295 = vpop.f32.mrf.mxu0
    %1296 = vmatprep.mubr.bf16.mxu0 0
    %1297 = vmatmul.mubr.bf16.gmra.mxu0 %v1199
    %v1298 = vpop.f32.mrf.mxu0
    %v1299 = vadd.f32 0.0, %v1298
    %v1300 = vpop.f32.mrf.mxu0
    %v1301 = vpop.f32.mrf.mxu0
    %v1302 = vadd.f32 0.0, %v1301
    %v1303 = vpop.f32.mrf.mxu0
    %1304 = vmatprep.mubr.bf16.mxu0 0
    %1305 = vmatmul.mubr.bf16.gmra.mxu0 %v1202
    %v1306 = vpop.f32.mrf.mxu0
    %v1307 = vadd.f32 0.0, %v1306
    %v1308 = vpop.f32.mrf.mxu0
    %v1309 = vpop.f32.mrf.mxu0
    %v1310 = vadd.f32 0.0, %v1309
    %v1311 = vpop.f32.mrf.mxu0
    %1312 = vmatprep.mubr.bf16.mxu0 0
    %1313 = vmatmul.mubr.bf16.gmra.mxu0 %v1205
    %v1314 = vpop.f32.mrf.mxu0
    %v1315 = vadd.f32 0.0, %v1314
    %v1316 = vpop.f32.mrf.mxu0
    %v1317 = vpop.f32.mrf.mxu0
    %v1318 = vadd.f32 0.0, %v1317
    %v1319 = vpop.f32.mrf.mxu0
    %1320 = vmatprep.mubr.bf16.mxu0 0
    %1321 = vmatmul.mubr.bf16.gmra.mxu0 %v1208
    %v1322 = vpop.f32.mrf.mxu0
    %v1323 = vadd.f32 0.0, %v1322
    %v1324 = vpop.f32.mrf.mxu0
    %v1325 = vpop.f32.mrf.mxu0
    %v1326 = vadd.f32 0.0, %v1325
    %v1327 = vpop.f32.mrf.mxu0
    %1328 = vmatprep.mubr.bf16.mxu0 0
    %1329 = vmatmul.mubr.bf16.gmra.mxu0 %v1211
    %v1330 = vpop.f32.mrf.mxu0
    %v1331 = vadd.f32 0.0, %v1330
    %v1332 = vpop.f32.mrf.mxu0
    %v1333 = vpop.f32.mrf.mxu0
    %v1334 = vadd.f32 0.0, %v1333
    %v1335 = vpop.f32.mrf.mxu0
    %1336 = vmatprep.mubr.bf16.mxu0 0
    %1337 = vmatmul.mubr.bf16.gmra.mxu0 %v1214
    %v1338 = vpop.f32.mrf.mxu0
    %v1339 = vadd.f32 0.0, %v1338
    %v1340 = vpop.f32.mrf.mxu0
    %v1341 = vpop.f32.mrf.mxu0
    %v1342 = vadd.f32 0.0, %v1341
    %v1343 = vpop.f32.mrf.mxu0
    %1344 = vmatprep.mubr.bf16.mxu0 0
    %1345 = vmatmul.mubr.bf16.gmra.mxu0 %v1217
    %v1346 = vpop.f32.mrf.mxu0
    %v1347 = vadd.f32 0.0, %v1346
    %v1348 = vpop.f32.mrf.mxu0
    %v1349 = vpop.f32.mrf.mxu0
    %v1350 = vadd.f32 0.0, %v1349
    %v1351 = vpop.f32.mrf.mxu0
    %1352 = vmatprep.mubr.bf16.mxu0 0
    %1353 = vmatmul.mubr.bf16.gmra.mxu0 %v1220
    %v1354 = vpop.f32.mrf.mxu0
    %v1355 = vadd.f32 0.0, %v1354
    %v1356 = vpop.f32.mrf.mxu0
    %v1357 = vpop.f32.mrf.mxu0
    %v1358 = vadd.f32 0.0, %v1357
    %v1359 = vpop.f32.mrf.mxu0
    %1360 = vmatprep.mubr.bf16.mxu0 0
    %1361 = vmatmul.mubr.bf16.gmra.mxu0 %v1223
    %v1362 = vpop.f32.mrf.mxu0
    %v1363 = vadd.f32 0.0, %v1362
    %v1364 = vpop.f32.mrf.mxu0
    %v1365 = vpop.f32.mrf.mxu0
    %v1366 = vadd.f32 0.0, %v1365
    %v1367 = vpop.f32.mrf.mxu0
    %1368 = vmatprep.mubr.bf16.mxu0 0
    %1369 = vmatmul.mubr.bf16.gmra.mxu0 %v1226
    %v1370 = vpop.f32.mrf.mxu0
    %v1371 = vadd.f32 0.0, %v1370
    %v1372 = vpop.f32.mrf.mxu0
    %v1373 = vpop.f32.mrf.mxu0
    %v1374 = vadd.f32 0.0, %v1373
    %v1375 = vpop.f32.mrf.mxu0
    %1376 = vmatprep.mubr.bf16.mxu0 0
    %1377 = vmatmul.mubr.bf16.gmra.mxu0 %v1229
    %v1378 = vpop.f32.mrf.mxu0
    %v1379 = vadd.f32 0.0, %v1378
    %v1380 = vpop.f32.mrf.mxu0
    %v1381 = vpop.f32.mrf.mxu0
    %v1382 = vadd.f32 0.0, %v1381
    %v1383 = vpop.f32.mrf.mxu0
    %1384 = vmatprep.mubr.bf16.mxu0 0
    %1385 = vmatmul.mubr.bf16.gmra.mxu0 %v1232
    %v1386 = vpop.f32.mrf.mxu0
    %v1387 = vadd.f32 0.0, %v1386
    %v1388 = vpop.f32.mrf.mxu0
    %v1389 = vpop.f32.mrf.mxu0
    %v1390 = vadd.f32 0.0, %v1389
    %v1391 = vpop.f32.mrf.mxu0
    %1392 = vmatprep.mubr.bf16.mxu0 0
    %1393 = vmatmul.mubr.bf16.gmra.mxu0 %v1235
    %v1394 = vpop.f32.mrf.mxu0
    %v1395 = vadd.f32 0.0, %v1394
    %v1396 = vpop.f32.mrf.mxu0
    %v1397 = vpop.f32.mrf.mxu0
    %v1398 = vadd.f32 0.0, %v1397
    %v1399 = vpop.f32.mrf.mxu0
    %1400 = vdwg.mxu0
    %v1401 = vadd.f32 %v882, %v1275
    %v1402 = vadd.f32 %v885, %v1278
    %v1403 = vadd.f32 %v890, %v1283
    %v1404 = vadd.f32 %v893, %v1286
    %v1405 = vadd.f32 %v898, %v1291
    %v1406 = vadd.f32 %v901, %v1294
    %v1407 = vadd.f32 %v906, %v1299
    %v1408 = vadd.f32 %v909, %v1302
    %v1409 = vadd.f32 %v914, %v1307
    %v1410 = vadd.f32 %v917, %v1310
    %v1411 = vadd.f32 %v922, %v1315
    %v1412 = vadd.f32 %v925, %v1318
    %v1413 = vadd.f32 %v930, %v1323
    %v1414 = vadd.f32 %v933, %v1326
    %v1415 = vadd.f32 %v938, %v1331
    %v1416 = vadd.f32 %v941, %v1334
    %v1417 = vadd.f32 %v946, %v1339
    %v1418 = vadd.f32 %v949, %v1342
    %v1419 = vadd.f32 %v954, %v1347
    %v1420 = vadd.f32 %v957, %v1350
    %v1421 = vadd.f32 %v962, %v1355
    %v1422 = vadd.f32 %v965, %v1358
    %v1423 = vadd.f32 %v970, %v1363
    %v1424 = vadd.f32 %v973, %v1366
    %v1425 = vadd.f32 %v978, %v1371
    %v1426 = vadd.f32 %v981, %v1374
    %v1427 = vadd.f32 %v986, %v1379
    %v1428 = vadd.f32 %v989, %v1382
    %v1429 = vadd.f32 %v994, %v1387
    %v1430 = vadd.f32 %v997, %v1390
    %v1431 = vadd.f32 %v1002, %v1395
    %v1432 = vadd.f32 %v1005, %v1398
    %v1433 = vld [vmem:[%s2 + $0x44] sm:$0x1]
    %v1434 = vlaneseq
    %v1435 = vshrl.u32 %v1434, 7
    %v1436 = vsub.s32 0, %v1435
    %v1437 = vrot.slane %v1433, %v1436
    %v1438 = vadd.f32 %v1401, %v1437
    %v1439 = vadd.f32 %v1402, %v1437
    %v1440 = vadd.f32 %v1403, %v1437
    %v1441 = vadd.f32 %v1404, %v1437
    %v1442 = vadd.f32 %v1405, %v1437
    %v1443 = vadd.f32 %v1406, %v1437
    %v1444 = vadd.f32 %v1407, %v1437
    %v1445 = vadd.f32 %v1408, %v1437
    %v1446 = vadd.f32 %v1409, %v1437
    %v1447 = vadd.f32 %v1410, %v1437
    %v1448 = vadd.f32 %v1411, %v1437
    %v1449 = vadd.f32 %v1412, %v1437
    %v1450 = vadd.f32 %v1413, %v1437
    %v1451 = vadd.f32 %v1414, %v1437
    %v1452 = vadd.f32 %v1415, %v1437
    %v1453 = vadd.f32 %v1416, %v1437
    %v1454 = vadd.f32 %v1417, %v1437
    %v1455 = vadd.f32 %v1418, %v1437
    %v1456 = vadd.f32 %v1419, %v1437
    %v1457 = vadd.f32 %v1420, %v1437
    %v1458 = vadd.f32 %v1421, %v1437
    %v1459 = vadd.f32 %v1422, %v1437
    %v1460 = vadd.f32 %v1423, %v1437
    %v1461 = vadd.f32 %v1424, %v1437
    %v1462 = vadd.f32 %v1425, %v1437
    %v1463 = vadd.f32 %v1426, %v1437
    %v1464 = vadd.f32 %v1427, %v1437
    %v1465 = vadd.f32 %v1428, %v1437
    %v1466 = vadd.f32 %v1429, %v1437
    %v1467 = vadd.f32 %v1430, %v1437
    %v1468 = vadd.f32 %v1431, %v1437
    %v1469 = vadd.f32 %v1432, %v1437
    %v1470 = vmax.f32 %v1438, 0.0
    %v1471 = vmax.f32 %v1439, 0.0
    %v1472 = vmax.f32 %v1440, 0.0
    %v1473 = vmax.f32 %v1441, 0.0
    %v1474 = vmax.f32 %v1442, 0.0
    %v1475 = vmax.f32 %v1443, 0.0
    %v1476 = vmax.f32 %v1444, 0.0
    %v1477 = vmax.f32 %v1445, 0.0
    %v1478 = vmax.f32 %v1446, 0.0
    %v1479 = vmax.f32 %v1447, 0.0
    %v1480 = vmax.f32 %v1448, 0.0
    %v1481 = vmax.f32 %v1449, 0.0
    %v1482 = vmax.f32 %v1450, 0.0
    %v1483 = vmax.f32 %v1451, 0.0
    %v1484 = vmax.f32 %v1452, 0.0
    %v1485 = vmax.f32 %v1453, 0.0
    %v1486 = vmax.f32 %v1454, 0.0
    %v1487 = vmax.f32 %v1455, 0.0
    %v1488 = vmax.f32 %v1456, 0.0
    %v1489 = vmax.f32 %v1457, 0.0
    %v1490 = vmax.f32 %v1458, 0.0
    %v1491 = vmax.f32 %v1459, 0.0
    %v1492 = vmax.f32 %v1460, 0.0
    %v1493 = vmax.f32 %v1461, 0.0
    %v1494 = vmax.f32 %v1462, 0.0
    %v1495 = vmax.f32 %v1463, 0.0
    %v1496 = vmax.f32 %v1464, 0.0
    %v1497 = vmax.f32 %v1465, 0.0
    %v1498 = vmax.f32 %v1466, 0.0
    %v1499 = vmax.f32 %v1467, 0.0
    %v1500 = vmax.f32 %v1468, 0.0
    %v1501 = vmax.f32 %v1469, 0.0
    %vm1502 = vcmask 261120
    %v1503 = vsel %vm1502, %v1470, 0.0
    %v1504 = vsel %vm1502, %v1471, 0.0
    %v1505 = vadd.f32 %v1503, %v1504
    %v1506 = vrot.slane %v1505, 4
    %v1507 = vadd.f32 %v1505, %v1506
    %v1508 = vrot.slane %v1507, 2
    %v1509 = vadd.f32 %v1507, %v1508
    %v1510 = vrot.slane %v1509, 1
    %v1511 = vadd.f32 %v1509, %v1510
    %v1512 = vsel %vm1502, %v1472, 0.0
    %v1513 = vsel %vm1502, %v1473, 0.0
    %v1514 = vadd.f32 %v1512, %v1513
    %v1515 = vrot.slane %v1514, 4
    %v1516 = vadd.f32 %v1514, %v1515
    %v1517 = vrot.slane %v1516, 2
    %v1518 = vadd.f32 %v1516, %v1517
    %v1519 = vrot.slane %v1518, 1
    %v1520 = vadd.f32 %v1518, %v1519
    %v1521 = vsel %vm1502, %v1474, 0.0
    %v1522 = vsel %vm1502, %v1475, 0.0
    %v1523 = vadd.f32 %v1521, %v1522
    %v1524 = vrot.slane %v1523, 4
    %v1525 = vadd.f32 %v1523, %v1524
    %v1526 = vrot.slane %v1525, 2
    %v1527 = vadd.f32 %v1525, %v1526
    %v1528 = vrot.slane %v1527, 1
    %v1529 = vadd.f32 %v1527, %v1528
    %v1530 = vsel %vm1502, %v1476, 0.0
    %v1531 = vsel %vm1502, %v1477, 0.0
    %v1532 = vadd.f32 %v1530, %v1531
    %v1533 = vrot.slane %v1532, 4
    %v1534 = vadd.f32 %v1532, %v1533
    %v1535 = vrot.slane %v1534, 2
    %v1536 = vadd.f32 %v1534, %v1535
    %v1537 = vrot.slane %v1536, 1
    %v1538 = vadd.f32 %v1536, %v1537
    %v1539 = vsel %vm1502, %v1478, 0.0
    %v1540 = vsel %vm1502, %v1479, 0.0
    %v1541 = vadd.f32 %v1539, %v1540
    %v1542 = vrot.slane %v1541, 4
    %v1543 = vadd.f32 %v1541, %v1542
    %v1544 = vrot.slane %v1543, 2
    %v1545 = vadd.f32 %v1543, %v1544
    %v1546 = vrot.slane %v1545, 1
    %v1547 = vadd.f32 %v1545, %v1546
    %v1548 = vsel %vm1502, %v1480, 0.0
    %v1549 = vsel %vm1502, %v1481, 0.0
    %v1550 = vadd.f32 %v1548, %v1549
    %v1551 = vrot.slane %v1550, 4
    %v1552 = vadd.f32 %v1550, %v1551
    %v1553 = vrot.slane %v1552, 2
    %v1554 = vadd.f32 %v1552, %v1553
    %v1555 = vrot.slane %v1554, 1
    %v1556 = vadd.f32 %v1554, %v1555
    %v1557 = vsel %vm1502, %v1482, 0.0
    %v1558 = vsel %vm1502, %v1483, 0.0
    %v1559 = vadd.f32 %v1557, %v1558
    %v1560 = vrot.slane %v1559, 4
    %v1561 = vadd.f32 %v1559, %v1560
    %v1562 = vrot.slane %v1561, 2
    %v1563 = vadd.f32 %v1561, %v1562
    %v1564 = vrot.slane %v1563, 1
    %v1565 = vadd.f32 %v1563, %v1564
    %v1566 = vsel %vm1502, %v1484, 0.0
    %v1567 = vsel %vm1502, %v1485, 0.0
    %v1568 = vadd.f32 %v1566, %v1567
    %v1569 = vrot.slane %v1568, 4
    %v1570 = vadd.f32 %v1568, %v1569
    %v1571 = vrot.slane %v1570, 2
    %v1572 = vadd.f32 %v1570, %v1571
    %v1573 = vrot.slane %v1572, 1
    %v1574 = vadd.f32 %v1572, %v1573
    %v1575 = vsel %vm1502, %v1486, 0.0
    %v1576 = vsel %vm1502, %v1487, 0.0
    %v1577 = vadd.f32 %v1575, %v1576
    %v1578 = vrot.slane %v1577, 4
    %v1579 = vadd.f32 %v1577, %v1578
    %v1580 = vrot.slane %v1579, 2
    %v1581 = vadd.f32 %v1579, %v1580
    %v1582 = vrot.slane %v1581, 1
    %v1583 = vadd.f32 %v1581, %v1582
    %v1584 = vsel %vm1502, %v1488, 0.0
    %v1585 = vsel %vm1502, %v1489, 0.0
    %v1586 = vadd.f32 %v1584, %v1585
    %v1587 = vrot.slane %v1586, 4
    %v1588 = vadd.f32 %v1586, %v1587
    %v1589 = vrot.slane %v1588, 2
    %v1590 = vadd.f32 %v1588, %v1589
    %v1591 = vrot.slane %v1590, 1
    %v1592 = vadd.f32 %v1590, %v1591
    %v1593 = vsel %vm1502, %v1490, 0.0
    %v1594 = vsel %vm1502, %v1491, 0.0
    %v1595 = vadd.f32 %v1593, %v1594
    %v1596 = vrot.slane %v1595, 4
    %v1597 = vadd.f32 %v1595, %v1596
    %v1598 = vrot.slane %v1597, 2
    %v1599 = vadd.f32 %v1597, %v1598
    %v1600 = vrot.slane %v1599, 1
    %v1601 = vadd.f32 %v1599, %v1600
    %v1602 = vsel %vm1502, %v1492, 0.0
    %v1603 = vsel %vm1502, %v1493, 0.0
    %v1604 = vadd.f32 %v1602, %v1603
    %v1605 = vrot.slane %v1604, 4
    %v1606 = vadd.f32 %v1604, %v1605
    %v1607 = vrot.slane %v1606, 2
    %v1608 = vadd.f32 %v1606, %v1607
    %v1609 = vrot.slane %v1608, 1
    %v1610 = vadd.f32 %v1608, %v1609
    %v1611 = vsel %vm1502, %v1494, 0.0
    %v1612 = vsel %vm1502, %v1495, 0.0
    %v1613 = vadd.f32 %v1611, %v1612
    %v1614 = vrot.slane %v1613, 4
    %v1615 = vadd.f32 %v1613, %v1614
    %v1616 = vrot.slane %v1615, 2
    %v1617 = vadd.f32 %v1615, %v1616
    %v1618 = vrot.slane %v1617, 1
    %v1619 = vadd.f32 %v1617, %v1618
    %v1620 = vsel %vm1502, %v1496, 0.0
    %v1621 = vsel %vm1502, %v1497, 0.0
    %v1622 = vadd.f32 %v1620, %v1621
    %v1623 = vrot.slane %v1622, 4
    %v1624 = vadd.f32 %v1622, %v1623
    %v1625 = vrot.slane %v1624, 2
    %v1626 = vadd.f32 %v1624, %v1625
    %v1627 = vrot.slane %v1626, 1
    %v1628 = vadd.f32 %v1626, %v1627
    %v1629 = vsel %vm1502, %v1498, 0.0
    %v1630 = vsel %vm1502, %v1499, 0.0
    %v1631 = vadd.f32 %v1629, %v1630
    %v1632 = vrot.slane %v1631, 4
    %v1633 = vadd.f32 %v1631, %v1632
    %v1634 = vrot.slane %v1633, 2
    %v1635 = vadd.f32 %v1633, %v1634
    %v1636 = vrot.slane %v1635, 1
    %v1637 = vadd.f32 %v1635, %v1636
    %v1638 = vsel %vm1502, %v1500, 0.0
    %v1639 = vsel %vm1502, %v1501, 0.0
    %v1640 = vadd.f32 %v1638, %v1639
    %v1641 = vrot.slane %v1640, 4
    %v1642 = vadd.f32 %v1640, %v1641
    %v1643 = vrot.slane %v1642, 2
    %v1644 = vadd.f32 %v1642, %v1643
    %v1645 = vrot.slane %v1644, 1
    %v1646 = vadd.f32 %v1644, %v1645
    %v1647 = vmul.f32 %v1511, 0.0625
    %v1648 = vmul.f32 %v1520, 0.0625
    %v1649 = vmul.f32 %v1529, 0.0625
    %v1650 = vmul.f32 %v1538, 0.0625
    %v1651 = vmul.f32 %v1547, 0.0625
    %v1652 = vmul.f32 %v1556, 0.0625
    %v1653 = vmul.f32 %v1565, 0.0625
    %v1654 = vmul.f32 %v1574, 0.0625
    %v1655 = vmul.f32 %v1583, 0.0625
    %v1656 = vmul.f32 %v1592, 0.0625
    %v1657 = vmul.f32 %v1601, 0.0625
    %v1658 = vmul.f32 %v1610, 0.0625
    %v1659 = vmul.f32 %v1619, 0.0625
    %v1660 = vmul.f32 %v1628, 0.0625
    %v1661 = vmul.f32 %v1637, 0.0625
    %v1662 = vmul.f32 %v1646, 0.0625
    %v1663 = vld [vmem:[%s2] sm:$0xff]
    %v1664 = vld [vmem:[%s2 + $0x8] sm:$0xff]
    %v1665 = vld [vmem:[%s2 + $0x10] sm:$0xff]
    %v1666 = vld [vmem:[%s2 + $0x18] sm:$0xff]
    %v1667 = vld [vmem:[%s2 + $0x40] sm:$0x1]
    %v1668 = vld [vmem:[%s2 + $0x42] sm:$0x1]
    %v1669 = vld [vmem:[%s2 + $0x45] sm:$0x1]
    %v1670 = vlaneseq
    %v1671 = vshrl.u32 %v1670, 7
    %v1672 = vsub.s32 0, %v1671
    %v1673 = vrot.slane %v1667, %v1672
    %vm1690 = vcmask 1041409
    %v1691 = vsel %vm1690, %v1648, %v1647
    %vm1692 = vcmask 1042434
    %v1693 = vsel %vm1692, %v1649, %v1691
    %vm1694 = vcmask 1043459
    %v1695 = vsel %vm1694, %v1650, %v1693
    %vm1696 = vcmask 1044484
    %v1697 = vsel %vm1696, %v1651, %v1695
    %vm1698 = vcmask 1045509
    %v1699 = vsel %vm1698, %v1652, %v1697
    %vm1700 = vcmask 1046534
    %v1701 = vsel %vm1700, %v1653, %v1699
    %vm1702 = vcmask 1047559
    %v1703 = vsel %vm1702, %v1654, %v1701
    %v1704 = vsel %vm1690, %v1656, %v1655
    %v1705 = vsel %vm1692, %v1657, %v1704
    %v1706 = vsel %vm1694, %v1658, %v1705
    %v1707 = vsel %vm1696, %v1659, %v1706
    %v1708 = vsel %vm1698, %v1660, %v1707
    %v1709 = vsel %vm1700, %v1661, %v1708
    %v1710 = vsel %vm1702, %v1662, %v1709
    %v1711 = vsel %vm1502, %v1703, 0
    %v1713 = vsel %vm1502, %v1710, 0
    %1715 = vmatprep.subr.mxu0 0.0
    %1716 = vmatpush1.msra.mxu0 0.0
    %1717 = vmatprep.subr.mxu0 0.0
    %1718 = vmatpush1.msra.mxu0 0.0
    %1719 = vmatprep.subr.mxu0 0.0
    %1720 = vmatpush1.msra.mxu0 0.0
    %1721 = vmatprep.subr.mxu0 0.0
    %1722 = vmatpush1.msra.mxu0 0.0
    %1723 = vmatprep.subr.mxu0 0.0
    %1724 = vmatpush1.msra.mxu0 0.0
    %1725 = vmatprep.subr.mxu0 0.0
    %1726 = vmatpush1.msra.mxu0 0.0
    %1727 = vmatprep.subr.mxu0 0.0
    %1728 = vmatpush1.msra.mxu0 0.0
    %1729 = vmatprep.subr.mxu0 0.0
    %1730 = vmatpush1.msra.mxu0 0.0
    %1731 = vmatprep.subr.mxu0 0.0
    %1732 = vmatpush1.msra.mxu0 0.0
    %1733 = vmatprep.subr.mxu0 0.0
    %1734 = vmatpush1.msra.mxu0 0.0
    %1735 = vmatprep.subr.mxu0 0.0
    %1736 = vmatpush1.msra.mxu0 0.0
    %1737 = vmatprep.subr.mxu0 0.0
    %1738 = vmatpush1.msra.mxu0 0.0
    %1739 = vmatprep.subr.mxu0 0.0
    %1740 = vmatpush1.msra.mxu0 %v1666
    %1741 = vmatprep.subr.mxu0 0.0
    %1742 = vmatpush1.msra.mxu0 %v1665
    %1743 = vmatprep.subr.mxu0 0.0
    %1744 = vmatpush1.msra.mxu0 %v1664
    %1745 = vmatprep.subr.mxu0 0.0
    %1746 = vmatpush1.msra.mxu0 %v1663
    %1747 = vmatprep.subr.mxu0 0.0
    %1748 = vmatpush2.msra.mxu0 0.0
    %1749 = vmatprep.subr.mxu0 0.0
    %1750 = vmatpush2.msra.mxu0 0.0
    %1751 = vmatprep.subr.mxu0 0.0
    %1752 = vmatpush2.msra.mxu0 0.0
    %1753 = vmatprep.subr.mxu0 0.0
    %1754 = vmatpush2.msra.mxu0 0.0
    %1755 = vmatprep.subr.mxu0 0.0
    %1756 = vmatpush2.msra.mxu0 0.0
    %1757 = vmatprep.subr.mxu0 0.0
    %1758 = vmatpush2.msra.mxu0 0.0
    %1759 = vmatprep.subr.mxu0 0.0
    %1760 = vmatpush2.msra.mxu0 0.0
    %1761 = vmatprep.subr.mxu0 0.0
    %1762 = vmatpush2.msra.mxu0 0.0
    %1763 = vmatprep.subr.mxu0 0.0
    %1764 = vmatpush2.msra.mxu0 0.0
    %1765 = vmatprep.subr.mxu0 0.0
    %1766 = vmatpush2.msra.mxu0 0.0
    %1767 = vmatprep.subr.mxu0 0.0
    %1768 = vmatpush2.msra.mxu0 0.0
    %1769 = vmatprep.subr.mxu0 0.0
    %1770 = vmatpush2.msra.mxu0 0.0
    %1771 = vmatprep.subr.mxu0 0.0
    %1772 = vmatpush2.msra.mxu0 0.0
    %1773 = vmatprep.subr.mxu0 0.0
    %1774 = vmatpush2.msra.mxu0 0.0
    %1775 = vmatprep.subr.mxu0 0.0
    %1776 = vmatpush2.msra.mxu0 0.0
    %1777 = vmatprep.subr.mxu0 0.0
    %1778 = vmatpush2.msra.mxu0 0.0
    %1779 = vmatprep.mubr.f32.mxu0 0.0
    %1780 = vmatmul.mubr.f32.gmra.mxu0 %v1711
    %v1781 = vpop.f32.mrf.mxu0
    %v1782 = vadd.f32 %v1673, %v1781
    %v1783 = vpop.f32.mrf.mxu0
    %1784 = vmatprep.mubr.f32.mxu0 0.0
    %1785 = vmatmul.mubr.f32.gmra.mxu0 %v1713
    %v1786 = vpop.f32.mrf.mxu0
    %v1787 = vadd.f32 %v1673, %v1786
    %v1788 = vpop.f32.mrf.mxu0
    %1789 = vdwg.mxu0
    %v1790 = vtanh.pop %v1782
    %v1791 = vtanh.pop %v1787
    %v1792 = vlaneseq
    %v1793 = vshrl.u32 %v1792, 7
    %v1794 = vsub.s32 0, %v1793
    %v1795 = vrot.slane %v1668, %v1794
    %v1796 = vmul.f32 %v1790, %v1795
    %v1797 = vmul.f32 %v1791, %v1795
    %1798 = vadd.xlane.f32.xlu0 %v1796
    %v1799 = vpop.xlane.xlu0 %1798
    %1800 = vadd.xlane.f32.xlu0 %v1797
    %v1801 = vpop.xlane.xlu0 %1800
    %v1802 = vlaneseq
    %v1803 = vshrl.u32 %v1802, 7
    %v1804 = vsub.s32 0, %v1803
    %v1805 = vrot.slane %v1669, %v1804
    %v1806 = vadd.f32 %v1799, %v1805
    %v1807 = vadd.f32 %v1801, %v1805
    %vm1808 = vcmask 7168
    %v1809 = vsel %vm1808, %v1806, -inf
    %v1810 = vrot.slane %v1809, 4
    %v1811 = vmax.f32 %v1809, %v1810
    %v1812 = vrot.slane %v1811, 2
    %v1813 = vmax.f32 %v1811, %v1812
    %v1814 = vrot.slane %v1813, 1
    %v1815 = vmax.f32 %v1813, %v1814
    %v1816 = vsel %vm1808, %v1807, -inf
    %v1817 = vrot.slane %v1816, 4
    %v1818 = vmax.f32 %v1816, %v1817
    %v1819 = vrot.slane %v1818, 2
    %v1820 = vmax.f32 %v1818, %v1819
    %v1821 = vrot.slane %v1820, 1
    %v1822 = vmax.f32 %v1820, %v1821
    %v1823 = vsub.f32 %v1806, %v1815
    %v1824 = vsub.f32 %v1807, %v1822
    %v1825 = vmul.f32 %v1823, 1.442695
    %v1826 = vpow.pop %v1825
    %v1827 = vmul.f32 %v1824, 1.442695
    %v1828 = vpow.pop %v1827
    %v1829 = vsel %vm1808, %v1826, 0.0
    %v1830 = vrot.slane %v1829, 4
    %v1831 = vadd.f32 %v1829, %v1830
    %v1832 = vrot.slane %v1831, 2
    %v1833 = vadd.f32 %v1831, %v1832
    %v1834 = vrot.slane %v1833, 1
    %v1835 = vadd.f32 %v1833, %v1834
    %v1836 = vsel %vm1808, %v1828, 0.0
    %v1837 = vrot.slane %v1836, 4
    %v1838 = vadd.f32 %v1836, %v1837
    %v1839 = vrot.slane %v1838, 2
    %v1840 = vadd.f32 %v1838, %v1839
    %v1841 = vrot.slane %v1840, 1
    %v1842 = vadd.f32 %v1840, %v1841
    %v1843 = vrcp.pop %v1835
    %v1844 = vrcp.pop %v1842
    %v1845 = vmul.f32 %v1826, %v1843
    %v1846 = vmul.f32 %v1828, %v1844
    %1848 = vset.pattern.permute.xlu0 0
    %1849 = vperm.xlu0 %1848, %v1845
    %v1850 = vpop.permute.xlu0 %1849
    %1853 = vset.pattern.permute.xlu0 0
    %1854 = vperm.xlu0 %1853, %v1846
    %v1855 = vpop.permute.xlu0 %1854
    %v1859 = vmul.f32 %v1850, %v1703
    %v1860 = vmul.f32 %v1855, %v1710
    %v1861 = vsel %vm1502, %v1859, 0.0
    %v1862 = vrot.slane %v1861, 4
    %v1863 = vadd.f32 %v1861, %v1862
    %v1864 = vrot.slane %v1863, 2
    %v1865 = vadd.f32 %v1863, %v1864
    %v1866 = vrot.slane %v1865, 1
    %v1867 = vadd.f32 %v1865, %v1866
    %v1868 = vsel %vm1502, %v1860, 0.0
    %v1869 = vrot.slane %v1868, 4
    %v1870 = vadd.f32 %v1868, %v1869
    %v1871 = vrot.slane %v1870, 2
    %v1872 = vadd.f32 %v1870, %v1871
    %v1873 = vrot.slane %v1872, 1
    %v1874 = vadd.f32 %v1872, %v1873
    %v1875 = vld [vmem:[%s2 + $0x20] sm:$0xff]
    %v1876 = vld [vmem:[%s2 + $0x28] sm:$0xff]
    %v1877 = vld [vmem:[%s2 + $0x30] sm:$0xff]
    %v1878 = vld [vmem:[%s2 + $0x38] sm:$0xff]
    %v1879 = vld [vmem:[%s2 + $0x41] sm:$0x1]
    %v1880 = vld [vmem:[%s2 + $0x43] sm:$0x1]
    %v1881 = vld [vmem:[%s2 + $0x46] sm:$0x1]
    %v1882 = vlaneseq
    %v1883 = vshrl.u32 %v1882, 7
    %v1884 = vsub.s32 0, %v1883
    %v1885 = vrot.slane %v1879, %v1884
    %v1888 = vsel %vm1690, %v1874, %v1867
    %v1889 = vsel %vm1502, %v1888, 0
    %1891 = vmatprep.subr.mxu0 0.0
    %1892 = vmatpush1.msra.mxu0 0.0
    %1893 = vmatprep.subr.mxu0 0.0
    %1894 = vmatpush1.msra.mxu0 0.0
    %1895 = vmatprep.subr.mxu0 0.0
    %1896 = vmatpush1.msra.mxu0 0.0
    %1897 = vmatprep.subr.mxu0 0.0
    %1898 = vmatpush1.msra.mxu0 0.0
    %1899 = vmatprep.subr.mxu0 0.0
    %1900 = vmatpush1.msra.mxu0 0.0
    %1901 = vmatprep.subr.mxu0 0.0
    %1902 = vmatpush1.msra.mxu0 0.0
    %1903 = vmatprep.subr.mxu0 0.0
    %1904 = vmatpush1.msra.mxu0 0.0
    %1905 = vmatprep.subr.mxu0 0.0
    %1906 = vmatpush1.msra.mxu0 0.0
    %1907 = vmatprep.subr.mxu0 0.0
    %1908 = vmatpush1.msra.mxu0 0.0
    %1909 = vmatprep.subr.mxu0 0.0
    %1910 = vmatpush1.msra.mxu0 0.0
    %1911 = vmatprep.subr.mxu0 0.0
    %1912 = vmatpush1.msra.mxu0 0.0
    %1913 = vmatprep.subr.mxu0 0.0
    %1914 = vmatpush1.msra.mxu0 0.0
    %1915 = vmatprep.subr.mxu0 0.0
    %1916 = vmatpush1.msra.mxu0 %v1878
    %1917 = vmatprep.subr.mxu0 0.0
    %1918 = vmatpush1.msra.mxu0 %v1877
    %1919 = vmatprep.subr.mxu0 0.0
    %1920 = vmatpush1.msra.mxu0 %v1876
    %1921 = vmatprep.subr.mxu0 0.0
    %1922 = vmatpush1.msra.mxu0 %v1875
    %1923 = vmatprep.subr.mxu0 0.0
    %1924 = vmatpush2.msra.mxu0 0.0
    %1925 = vmatprep.subr.mxu0 0.0
    %1926 = vmatpush2.msra.mxu0 0.0
    %1927 = vmatprep.subr.mxu0 0.0
    %1928 = vmatpush2.msra.mxu0 0.0
    %1929 = vmatprep.subr.mxu0 0.0
    %1930 = vmatpush2.msra.mxu0 0.0
    %1931 = vmatprep.subr.mxu0 0.0
    %1932 = vmatpush2.msra.mxu0 0.0
    %1933 = vmatprep.subr.mxu0 0.0
    %1934 = vmatpush2.msra.mxu0 0.0
    %1935 = vmatprep.subr.mxu0 0.0
    %1936 = vmatpush2.msra.mxu0 0.0
    %1937 = vmatprep.subr.mxu0 0.0
    %1938 = vmatpush2.msra.mxu0 0.0
    %1939 = vmatprep.subr.mxu0 0.0
    %1940 = vmatpush2.msra.mxu0 0.0
    %1941 = vmatprep.subr.mxu0 0.0
    %1942 = vmatpush2.msra.mxu0 0.0
    %1943 = vmatprep.subr.mxu0 0.0
    %1944 = vmatpush2.msra.mxu0 0.0
    %1945 = vmatprep.subr.mxu0 0.0
    %1946 = vmatpush2.msra.mxu0 0.0
    %1947 = vmatprep.subr.mxu0 0.0
    %1948 = vmatpush2.msra.mxu0 0.0
    %1949 = vmatprep.subr.mxu0 0.0
    %1950 = vmatpush2.msra.mxu0 0.0
    %1951 = vmatprep.subr.mxu0 0.0
    %1952 = vmatpush2.msra.mxu0 0.0
    %1953 = vmatprep.subr.mxu0 0.0
    %1954 = vmatpush2.msra.mxu0 0.0
    %1955 = vmatprep.mubr.f32.mxu0 0.0
    %1956 = vmatmul.mubr.f32.gmra.mxu0 %v1889
    %v1957 = vpop.f32.mrf.mxu0
    %v1958 = vadd.f32 %v1885, %v1957
    %v1959 = vpop.f32.mrf.mxu0
    %1960 = vdwg.mxu0
    %v1961 = vmax.f32 %v1958, 0.0
    %v1962 = vlaneseq
    %v1963 = vshrl.u32 %v1962, 7
    %v1964 = vsub.s32 0, %v1963
    %v1965 = vrot.slane %v1880, %v1964
    %v1966 = vmul.f32 %v1961, %v1965
    %v1967 = vsel %vm551, %v1966, 0.0
    %1968 = vadd.xlane.f32.xlu0 %v1967
    %v1969 = vpop.xlane.xlu0 %1968
    %v1970 = vlaneseq
    %v1971 = vshrl.u32 %v1970, 7
    %v1972 = vsub.s32 0, %v1971
    %v1973 = vrot.slane %v1881, %v1972
    %v1974 = vadd.f32 %v1969, %v1973
    %v1975 = vlaneseq
    %v1976 = vshrl.u32 %v1975, 7
    %v1977 = vlaneseq
    %v1978 = vand.u32 %v1977, 127
    %vm1979 = vcmp.eq.s32.totalorder %v1976, %v1978
    %v1980 = vsel %vm1979, 1, 0
    %v1981 = vcvt.s32.f32 %v1980
    %v1982 = vmul.f32 %v1850, %v1981
    %v1983 = vmul.f32 %v1855, %v1981
    %vm1984 = vcmask 64512
    %v1985 = vsel %vm1984, %v1982, 0.0
    %v1986 = vrot.slane %v1985, 4
    %v1987 = vadd.f32 %v1985, %v1986
    %v1988 = vrot.slane %v1987, 2
    %v1989 = vadd.f32 %v1987, %v1988
    %v1990 = vrot.slane %v1989, 1
    %v1991 = vadd.f32 %v1989, %v1990
    %v1992 = vsel %vm1984, %v1983, 0.0
    %v1993 = vrot.slane %v1992, 4
    %v1994 = vadd.f32 %v1992, %v1993
    %v1995 = vrot.slane %v1994, 2
    %v1996 = vadd.f32 %v1994, %v1995
    %v1997 = vrot.slane %v1996, 1
    %v1998 = vadd.f32 %v1996, %v1997
    %v2001 = vsel %vm1690, %v1998, %v1991
    %2004 = vrot.lane.b32.xlu0 %v1974, 8
    %v2005 = vpop.permute.xlu0 %2004
    %v2007 = vsel %vm1984, %v2001, %v2005
    %vm2008 = vcmask 72704
    %v2009 = vsel %vm2008, %v2007, 0.0
    %2010 = vst [vmem:[#allocation2] sm:$0x3] %v2009
    // Predicated region
    $region14: #{tpu_custom_call.1} parent=1 // pred_check
      _
    $region15: #{tpu_custom_call.1} parent=1 // pred_check_branch
      %2012 = sbr.rel (0) target = $region17
    $region16: #{tpu_custom_call.1} parent=1 // pred_region
      %s2014 = ssub.s32 32, 32
      %2015 = vsyncadd [#allocation3], %s2014
      %s2017 = sshll.u32 [#allocation2], 4
      %s2018 = int_to_ptr.vmem [resolvable:$true] %s2017
      %2020 = dma.vmem_to_hbm [thread:$0]  %s2018, 32, %s3, [#allocation3]
    $region17: #{tpu_custom_call.1} parent=1 // pred_fallthru
      _
    // Predicated region
    $region18: #{tpu_custom_call.1} parent=1 // pred_check
      _
    $region19: #{tpu_custom_call.1} parent=1 // pred_check_branch
      %2022 = sbr.rel (0) target = $region21
    $region20: #{tpu_custom_call.1} parent=1 // pred_region
      %2023 = dma.done [#allocation3], 32
    $region21: #{tpu_custom_call.1} parent=1 // pred_fallthru
      _
    %2024 = vsyncpa [#allocation3], 1

</llo_original>
